<compile_context>
chip_gen: v5e
topology: v5e:2x2
jax: 0.10.0
libtpu: 0.0.40
codegen_flags: <defaults>
</compile_context>

<pallas_src>
import math
from functools import partial

import jax
import jax.numpy as jnp
from jax.experimental import pallas as pl
from jax.experimental.pallas import tpu as pltpu

# ----------------------------- config (scale='es', small) -------------------
BATCH = 2
N_CHANNEL = [4, 4]
SEQ_LEN = [16, 16]
PATCH_SIZE = [8, 8]
D_MODEL = 128
NUM_LAYER = 2
N_HEAD = 4
EXPANSION = 4
D_FF = D_MODEL * EXPANSION
MAX_PATCH_NUMS = 16
LN_EPS = 1e-5


# ----------------------------- helpers ---------------------------------------
def _layer_norm(x, g, b, eps=LN_EPS):
    m = jnp.mean(x, axis=-1, keepdims=True)
    v = jnp.mean((x - m) * (x - m), axis=-1, keepdims=True)
    return (x - m) * jax.lax.rsqrt(v + eps) * g + b


# ----------------------------- the fused Pallas kernel -----------------------
def dsvit_kernel(p0_ref, p1_ref, emb0_ref, emb1_ref, cls_ref, pos_ref,
                 wqkv_ref, bqkv_ref, wo_ref, w1_ref, b1_ref, w2_ref, vecs_ref,
                 out_ref, x_scr, *, n_head, n0, n1, s_pad):
    layer = pl.program_id(0)
    n_layers = pl.num_programs(0)

    B = p0_ref.shape[0]
    D = emb0_ref.shape[1]
    H = n_head
    dh = D // H
    s_real = B + n0 + n1          # torch broadcast quirk: B identical CLS rows
    BS = B * s_pad

    # ---- layer 0: patch embedding, +pos, CLS rows, zero pad -> x scratch ----
    @pl.when(layer == 0)
    def _build_tokens():
        pos = pos_ref[...]                                      # (1+MAX, D) f32
        e0 = jnp.einsum("bpc,cd->bpd", p0_ref[...].astype(jnp.bfloat16),
                        emb0_ref[...], preferred_element_type=jnp.float32)
        e1 = jnp.einsum("bpc,cd->bpd", p1_ref[...].astype(jnp.bfloat16),
                        emb1_ref[...], preferred_element_type=jnp.float32)
        e0 = e0 + pos[1:1 + n0, :]
        e1 = e1 + pos[1:1 + n1, :]
        cls_vec = cls_ref[...] + pos[0:1, :]                    # (1, D)
        if s_pad > s_real:
            zero_pad = jnp.zeros((s_pad - s_real, D), jnp.float32)
        for b in range(B):                                      # static unroll
            base = b * s_pad
            x_scr[pl.ds(base, B), :] = jnp.broadcast_to(cls_vec, (B, D))
            x_scr[pl.ds(base + B, n0), :] = e0[b]
            x_scr[pl.ds(base + B + n0, n1), :] = e1[b]
            if s_pad > s_real:
                x_scr[pl.ds(base + s_real, s_pad - s_real), :] = zero_pad

    # ---- this layer's weights (auto-pipelined per-layer blocks, VMEM) ----
    wqkv = wqkv_ref[0]            # (D, 3D)  bf16 (Q pre-scaled by 1/sqrt(dh))
    bqkv = bqkv_ref[0]            # (1, 3D)  f32
    wo = wo_ref[0]                # (D, D)   bf16
    w1 = w1_ref[0]                # (D, F)   bf16
    b1 = b1_ref[0]                # (1, F)   f32
    w2 = w2_ref[0]                # (F, D)   bf16
    vecs = vecs_ref[0]            # (8, D)   f32 packed small vectors
    bo, b2 = vecs[0:1, :], vecs[1:2, :]
    ln1g, ln1b = vecs[2:3, :], vecs[3:4, :]
    ln2g, ln2b = vecs[4:5, :], vecs[5:6, :]

    x = x_scr[...]                # (BS, D) f32, flat token operand

    # ---- fused QKV projection: one lane-dense (BS,D)@(D,3D) MXU pass ----
    qkv = jnp.dot(x.astype(jnp.bfloat16), wqkv,
                  preferred_element_type=jnp.float32) + bqkv    # (BS, 3D)
    qkv = qkv.reshape(B, s_pad, 3 * D)

    if s_pad > s_real:            # additive key mask for pad tokens
        kidx = jax.lax.broadcasted_iota(jnp.int32, (1, 1, s_pad), 2)
        kmask = jnp.where(kidx < s_real, 0.0, -1e30).astype(jnp.float32)
    else:
        kmask = None

    # ---- attention: per-head scores/context, single K=128 output matmul ----
    ctx_heads = []
    for h in range(H):            # static unroll over heads
        qh = qkv[:, :, h * dh:(h + 1) * dh].astype(jnp.bfloat16)
        kh = qkv[:, :, D + h * dh:D + (h + 1) * dh].astype(jnp.bfloat16)
        vh = qkv[:, :, 2 * D + h * dh:2 * D + (h + 1) * dh].astype(jnp.bfloat16)
        s = jnp.einsum("bqd,bkd->bqk", qh, kh,
                       preferred_element_type=jnp.float32)
        if kmask is not None:
            s = s + kmask
        s = s - jnp.max(s, axis=-1, keepdims=True)
        p = jnp.exp(s)
        p = p * pl.reciprocal(jnp.sum(p, axis=-1, keepdims=True), approx=True)
        ctx_heads.append(jnp.einsum("bqk,bkd->bqd", p.astype(jnp.bfloat16), vh,
                                    preferred_element_type=jnp.float32))
    ctx = jnp.concatenate(ctx_heads, axis=-1).reshape(BS, D)    # (BS, D)

    attn = jnp.dot(ctx.astype(jnp.bfloat16), wo,
                   preferred_element_type=jnp.float32) + bo
    x = _layer_norm(x + attn, ln1g, ln1b)

    # ---- FFN ----
    hdn = jnp.dot(x.astype(jnp.bfloat16), w1,
                  preferred_element_type=jnp.float32) + b1
    hdn = jax.nn.gelu(hdn)        # TODO(synk): PyTorch nn.GELU default is exact erf
    ffn = jnp.dot(hdn.astype(jnp.bfloat16), w2,
                  preferred_element_type=jnp.float32) + b2
    x = _layer_norm(x + ffn, ln2g, ln2b)

    x_scr[...] = x                # carry to next layer (persistent scratch)

    # ---- last layer: final LayerNorm on the CLS row, store (B, D) ----
    @pl.when(layer == n_layers - 1)
    def _finalize():
        rows = jnp.concatenate([x[b * s_pad:b * s_pad + 1, :] for b in range(B)],
                               axis=0)                          # (B, D)
        out_ref[...] = _layer_norm(rows, vecs[6:7, :],
                                   vecs[7:8, :]).astype(out_ref.dtype)


# ----------------------------- wrapper ----------------------------------------
def pickup_patching(x, patch_size):
    B, C, S = x.shape
    assert S % patch_size == 0
    x = x.reshape(B, C, S // patch_size, patch_size)
    x = jnp.transpose(x, (0, 2, 1, 3))
    return x.reshape(B, S // patch_size, C * patch_size)


def dsvit_forward(x0, x1, kp):
    # patching is a cheap static reshape/transpose; everything else is one kernel
    p0 = pickup_patching(x0, PATCH_SIZE[0])
    p1 = pickup_patching(x1, PATCH_SIZE[1])
    B = p0.shape[0]
    n0, n1 = p0.shape[1], p1.shape[1]
    s_real = B + n0 + n1
    s_pad = ((s_real + 7) // 8) * 8

    full3 = lambda l: (0, 0, 0)
    full2 = lambda l: (0, 0)
    per_layer = lambda l: (l, 0, 0)

    grid_spec = pltpu.PrefetchScalarGridSpec(
        num_scalar_prefetch=0,
        grid=(NUM_LAYER,),
        in_specs=[
            pl.BlockSpec(p0.shape, full3),
            pl.BlockSpec(p1.shape, full3),
            pl.BlockSpec(kp["emb0"].shape, full2),
            pl.BlockSpec(kp["emb1"].shape, full2),
            pl.BlockSpec(kp["cls"].shape, full2),
            pl.BlockSpec(kp["pos"].shape, full2),
            pl.BlockSpec((1,) + kp["wqkv"].shape[1:], per_layer),
            pl.BlockSpec((1,) + kp["bqkv"].shape[1:], per_layer),
            pl.BlockSpec((1,) + kp["wo"].shape[1:], per_layer),
            pl.BlockSpec((1,) + kp["w1"].shape[1:], per_layer),
            pl.BlockSpec((1,) + kp["b1"].shape[1:], per_layer),
            pl.BlockSpec((1,) + kp["w2"].shape[1:], per_layer),
            pl.BlockSpec((1,) + kp["vecs"].shape[1:], per_layer),
        ],
        out_specs=pl.BlockSpec((B, D_MODEL), full2),
        scratch_shapes=[pltpu.VMEM((B * s_pad, D_MODEL), jnp.float32)],
    )

    return pl.pallas_call(
        partial(dsvit_kernel, n_head=N_HEAD, n0=n0, n1=n1, s_pad=s_pad),
        out_shape=jax.ShapeDtypeStruct((B, D_MODEL), jnp.float32),
        grid_spec=grid_spec,
        compiler_params=pltpu.CompilerParams(
            dimension_semantics=("arbitrary",),
            vmem_limit_bytes=32 * 1024 * 1024,
        ),
    )(p0, p1, kp["emb0"], kp["emb1"], kp["cls"], kp["pos"],
      kp["wqkv"], kp["bqkv"], kp["wo"], kp["w1"], kp["b1"], kp["w2"],
      kp["vecs"])


# ----------------------------- deterministic init + packing -------------------
def xavier(key, shape, fan_in, fan_out):
    bound = math.sqrt(6.0 / (fan_in + fan_out))
    return jax.random.uniform(key, shape, jnp.float32, -bound, bound)


def make_params(key):
    keys = jax.random.split(key, 16)
    L, D, F = NUM_LAYER, D_MODEL, D_FF
    in0 = N_CHANNEL[0] * PATCH_SIZE[0]
    in1 = N_CHANNEL[1] * PATCH_SIZE[1]
    return {
        "emb0": xavier(keys[0], (in0, D), in0, D),
        "emb1": xavier(keys[1], (in1, D), in1, D),
        "cls": xavier(keys[2], (1, 1, D), 1, D),
        "pos": xavier(keys[3], (1, 1 + MAX_PATCH_NUMS, D), 1 + MAX_PATCH_NUMS, D),
        "wq": xavier(keys[4], (L, D, D), D, D),
        "wk": xavier(keys[5], (L, D, D), D, D),
        "wv": xavier(keys[6], (L, D, D), D, D),
        "wo": xavier(keys[7], (L, D, D), D, D),
        "w1": xavier(keys[8], (L, D, F), D, F),
        "w2": xavier(keys[9], (L, F, D), F, D),
        "bq": jax.random.uniform(keys[10], (L, 1, D), jnp.float32, -0.05, 0.05),
        "bk": jax.random.uniform(keys[11], (L, 1, D), jnp.float32, -0.05, 0.05),
        "bv": jax.random.uniform(keys[12], (L, 1, D), jnp.float32, -0.05, 0.05),
        "bo": jax.random.uniform(keys[13], (L, 1, D), jnp.float32, -0.05, 0.05),
        "b1": jax.random.uniform(keys[14], (L, 1, F), jnp.float32, -0.05, 0.05),
        "b2": jax.random.uniform(keys[15], (L, 1, D), jnp.float32, -0.05, 0.05),
        "ln1g": jnp.ones((L, 1, D), jnp.float32),
        "ln1b": jnp.zeros((L, 1, D), jnp.float32),
        "ln2g": jnp.ones((L, 1, D), jnp.float32),
        "ln2b": jnp.zeros((L, 1, D), jnp.float32),
        "fng": jnp.ones((1, D), jnp.float32),
        "fnb": jnp.zeros((1, D), jnp.float32),
    }


def pack_params(p):
    """One-time repack into the kernel layout: bf16 weights, fused QKV with
    1/sqrt(dh) folded into Q, plain (L,D,D) W_O, packed small vectors."""
    L, D = NUM_LAYER, D_MODEL
    dh = D // N_HEAD
    scale = 1.0 / math.sqrt(dh)
    wqkv = jnp.concatenate([p["wq"] * scale, p["wk"], p["wv"]], axis=-1)  # (L,D,3D)
    bqkv = jnp.concatenate([p["bq"] * scale, p["bk"], p["bv"]], axis=-1)  # (L,1,3D)
    vecs = jnp.concatenate([
        p["bo"], p["b2"], p["ln1g"], p["ln1b"], p["ln2g"], p["ln2b"],
        jnp.broadcast_to(p["fng"][None, :, :], (L, 1, D)),
        jnp.broadcast_to(p["fnb"][None, :, :], (L, 1, D)),
    ], axis=1)                                                            # (L,8,D)
    return {
        "emb0": p["emb0"].astype(jnp.bfloat16),
        "emb1": p["emb1"].astype(jnp.bfloat16),
        "cls": p["cls"].reshape(1, D),
        "pos": p["pos"].reshape(1 + MAX_PATCH_NUMS, D),
        "wqkv": wqkv.astype(jnp.bfloat16),
        "bqkv": bqkv,
        "wo": p["wo"].astype(jnp.bfloat16),
        "w1": p["w1"].astype(jnp.bfloat16),
        "b1": p["b1"],
        "w2": p["w2"].astype(jnp.bfloat16),
        "vecs": vecs,
    }


# ----------------------------- main --------------------------------------------
if __name__ == "__main__":
    key = jax.random.PRNGKey(0)
    kx0, kx1, kprm = jax.random.split(key, 3)

    x0 = jax.random.normal(kx0, (BATCH, N_CHANNEL[0], SEQ_LEN[0]), jnp.float32)
    x1 = jax.random.normal(kx1, (BATCH, N_CHANNEL[1], SEQ_LEN[1]), jnp.float32)
    kp = jax.tree_util.tree_map(jax.block_until_ready, pack_params(make_params(kprm)))

    out = jax.jit(dsvit_forward)(x0, x1, kp)
    out = jax.block_until_ready(out)

    assert out.shape == (BATCH, D_MODEL), out.shape
    assert jnp.all(jnp.isfinite(out))
    print("KERNEL_OK")
</pallas_src>

<mosaic_0001>
module attributes {stable_mosaic.version = 11 : i64} {
  func.func @dsvit_kernel(%arg0: i32, %arg1: memref<2x2x32xf32, #tpu.memory_space<vmem>>, %arg2: memref<2x2x32xf32, #tpu.memory_space<vmem>>, %arg3: memref<32x128xbf16, #tpu.memory_space<vmem>>, %arg4: memref<32x128xbf16, #tpu.memory_space<vmem>>, %arg5: memref<1x128xf32, #tpu.memory_space<vmem>>, %arg6: memref<17x128xf32, #tpu.memory_space<vmem>>, %arg7: memref<1x128x384xbf16, #tpu.memory_space<vmem>>, %arg8: memref<1x1x384xf32, #tpu.memory_space<vmem>>, %arg9: memref<1x128x128xbf16, #tpu.memory_space<vmem>>, %arg10: memref<1x128x512xbf16, #tpu.memory_space<vmem>>, %arg11: memref<1x1x512xf32, #tpu.memory_space<vmem>>, %arg12: memref<1x512x128xbf16, #tpu.memory_space<vmem>>, %arg13: memref<1x8x128xf32, #tpu.memory_space<vmem>>, %arg14: memref<2x128xf32, #tpu.memory_space<vmem>>, %arg15: memref<16x128xf32, #tpu.memory_space<vmem>>) attributes {dimension_semantics = [#tpu.dimension_semantics<arbitrary>], iteration_bounds = array<i64: 2>, scalar_prefetch = 0 : i64, scratch_operands = 1 : i64, tpu.core_type = #tpu.core_type<tc>, window_params = [{pipeline_mode = #tpu.pipeline_mode<synchronous>, transform_indices = @transform_0, window_bounds = array<i64: 2, 2, 32>}, {pipeline_mode = #tpu.pipeline_mode<synchronous>, transform_indices = @transform_1, window_bounds = array<i64: 2, 2, 32>}, {pipeline_mode = #tpu.pipeline_mode<synchronous>, transform_indices = @transform_2, window_bounds = array<i64: 32, 128>}, {pipeline_mode = #tpu.pipeline_mode<synchronous>, transform_indices = @transform_3, window_bounds = array<i64: 32, 128>}, {pipeline_mode = #tpu.pipeline_mode<synchronous>, transform_indices = @transform_4, window_bounds = array<i64: 1, 128>}, {pipeline_mode = #tpu.pipeline_mode<synchronous>, transform_indices = @transform_5, window_bounds = array<i64: 17, 128>}, {transform_indices = @transform_6, window_bounds = array<i64: 1, 128, 384>}, {transform_indices = @transform_7, window_bounds = array<i64: 1, 1, 384>}, {transform_indices = @transform_8, window_bounds = array<i64: 1, 128, 128>}, {transform_indices = @transform_9, window_bounds = array<i64: 1, 128, 512>}, {transform_indices = @transform_10, window_bounds = array<i64: 1, 1, 512>}, {transform_indices = @transform_11, window_bounds = array<i64: 1, 512, 128>}, {transform_indices = @transform_12, window_bounds = array<i64: 1, 8, 128>}, {pipeline_mode = #tpu.pipeline_mode<synchronous>, transform_indices = @transform_13, window_bounds = array<i64: 2, 128>}]} {
    %c0_i32 = arith.constant 0 : i32
    %0 = arith.cmpi eq, %arg0, %c0_i32 : i32
    %1 = arith.extui %0 : i1 to i32
    %c0_i32_0 = arith.constant 0 : i32
    %2 = arith.cmpi ne, %1, %c0_i32_0 : i32
    scf.if %2 {
      %c0_61 = arith.constant 0 : index
      %c0_62 = arith.constant 0 : index
      %200 = vector.load %arg6[%c0_61, %c0_62] : memref<17x128xf32, #tpu.memory_space<vmem>>, vector<17x128xf32>
      %c0_63 = arith.constant 0 : index
      %c0_64 = arith.constant 0 : index
      %c0_65 = arith.constant 0 : index
      %201 = vector.load %arg1[%c0_63, %c0_64, %c0_65] : memref<2x2x32xf32, #tpu.memory_space<vmem>>, vector<2x2x32xf32>
      %202 = arith.truncf %201 : vector<2x2x32xf32> to vector<2x2x32xbf16>
      %c0_66 = arith.constant 0 : index
      %c0_67 = arith.constant 0 : index
      %203 = vector.load %arg3[%c0_66, %c0_67] : memref<32x128xbf16, #tpu.memory_space<vmem>>, vector<32x128xbf16>
      "tpu.trace_start"() <{level = 10 : i32, message = "bpc,cd->bpd"}> : () -> ()
      %cst_68 = arith.constant dense<0.000000e+00> : vector<2x2x128xf32>
      %204 = tpu.matmul %202, %203, %cst_68 {dimension_numbers = #tpu.dot_dimension_numbers<[2], [0], [0, 1], [1], [0, 0, 0, 1, 1, 1], [], []>} : vector<2x2x32xbf16>, vector<32x128xbf16>, vector<2x2x128xf32> -> vector<2x2x128xf32>
      "tpu.trace_stop"() : () -> ()
      %c0_69 = arith.constant 0 : index
      %c0_70 = arith.constant 0 : index
      %c0_71 = arith.constant 0 : index
      %205 = vector.load %arg2[%c0_69, %c0_70, %c0_71] : memref<2x2x32xf32, #tpu.memory_space<vmem>>, vector<2x2x32xf32>
      %206 = arith.truncf %205 : vector<2x2x32xf32> to vector<2x2x32xbf16>
      %c0_72 = arith.constant 0 : index
      %c0_73 = arith.constant 0 : index
      %207 = vector.load %arg4[%c0_72, %c0_73] : memref<32x128xbf16, #tpu.memory_space<vmem>>, vector<32x128xbf16>
      "tpu.trace_start"() <{level = 10 : i32, message = "bpc,cd->bpd"}> : () -> ()
      %cst_74 = arith.constant dense<0.000000e+00> : vector<2x2x128xf32>
      %208 = tpu.matmul %206, %207, %cst_74 {dimension_numbers = #tpu.dot_dimension_numbers<[2], [0], [0, 1], [1], [0, 0, 0, 1, 1, 1], [], []>} : vector<2x2x32xbf16>, vector<32x128xbf16>, vector<2x2x128xf32> -> vector<2x2x128xf32>
      "tpu.trace_stop"() : () -> ()
      %209 = vector.extract_strided_slice %200 {offsets = [1, 0], sizes = [2, 128], strides = [1, 1]} : vector<17x128xf32> to vector<2x128xf32>
      %210 = vector.shape_cast %209 : vector<2x128xf32> to vector<1x2x128xf32>
      %211 = vector.broadcast %210 : vector<1x2x128xf32> to vector<2x2x128xf32>
      %212 = arith.addf %204, %211 : vector<2x2x128xf32>
      %213 = vector.extract_strided_slice %200 {offsets = [1, 0], sizes = [2, 128], strides = [1, 1]} : vector<17x128xf32> to vector<2x128xf32>
      %214 = vector.shape_cast %213 : vector<2x128xf32> to vector<1x2x128xf32>
      %215 = vector.broadcast %214 : vector<1x2x128xf32> to vector<2x2x128xf32>
      %216 = arith.addf %208, %215 : vector<2x2x128xf32>
      %c0_75 = arith.constant 0 : index
      %c0_76 = arith.constant 0 : index
      %217 = vector.load %arg5[%c0_75, %c0_76] : memref<1x128xf32, #tpu.memory_space<vmem>>, vector<1x128xf32>
      %218 = vector.extract_strided_slice %200 {offsets = [0, 0], sizes = [1, 128], strides = [1, 1]} : vector<17x128xf32> to vector<1x128xf32>
      %219 = arith.addf %217, %218 : vector<1x128xf32>
      %cst_77 = arith.constant 0.000000e+00 : f32
      %220 = vector.broadcast %cst_77 : f32 to vector<2x128xf32>
      %221 = vector.shape_cast %219 : vector<1x128xf32> to vector<1x128xf32>
      %222 = vector.broadcast %221 : vector<1x128xf32> to vector<2x128xf32>
      %c0_78 = arith.constant 0 : index
      %c0_79 = arith.constant 0 : index
      %223 = vector.load %arg15[%c0_78, %c0_79] : memref<16x128xf32, #tpu.memory_space<vmem>>, vector<2x128xf32>
      tpu.vector_store %arg15[%c0_78, %c0_79], %222 {strides = array<i32>} : memref<16x128xf32, #tpu.memory_space<vmem>>, vector<2x128xf32>,
      %224 = vector.extract_strided_slice %212 {offsets = [0, 0, 0], sizes = [1, 2, 128], strides = [1, 1, 1]} : vector<2x2x128xf32> to vector<1x2x128xf32>
      %225 = vector.shape_cast %224 : vector<1x2x128xf32> to vector<2x128xf32>
      %c2 = arith.constant 2 : index
      %c0_80 = arith.constant 0 : index
      %226 = vector.load %arg15[%c2, %c0_80] : memref<16x128xf32, #tpu.memory_space<vmem>>, vector<2x128xf32>
      tpu.vector_store %arg15[%c2, %c0_80], %225 {strides = array<i32>} : memref<16x128xf32, #tpu.memory_space<vmem>>, vector<2x128xf32>,
      %227 = vector.extract_strided_slice %216 {offsets = [0, 0, 0], sizes = [1, 2, 128], strides = [1, 1, 1]} : vector<2x2x128xf32> to vector<1x2x128xf32>
      %228 = vector.shape_cast %227 : vector<1x2x128xf32> to vector<2x128xf32>
      %c4 = arith.constant 4 : index
      %c0_81 = arith.constant 0 : index
      %229 = vector.load %arg15[%c4, %c0_81] : memref<16x128xf32, #tpu.memory_space<vmem>>, vector<2x128xf32>
      tpu.vector_store %arg15[%c4, %c0_81], %228 {strides = array<i32>} : memref<16x128xf32, #tpu.memory_space<vmem>>, vector<2x128xf32>,
      %c6 = arith.constant 6 : index
      %c0_82 = arith.constant 0 : index
      %230 = vector.load %arg15[%c6, %c0_82] : memref<16x128xf32, #tpu.memory_space<vmem>>, vector<2x128xf32>
      tpu.vector_store %arg15[%c6, %c0_82], %220 {strides = array<i32>} : memref<16x128xf32, #tpu.memory_space<vmem>>, vector<2x128xf32>,
      %231 = vector.shape_cast %219 : vector<1x128xf32> to vector<1x128xf32>
      %232 = vector.broadcast %231 : vector<1x128xf32> to vector<2x128xf32>
      %c8 = arith.constant 8 : index
      %c0_83 = arith.constant 0 : index
      %233 = vector.load %arg15[%c8, %c0_83] : memref<16x128xf32, #tpu.memory_space<vmem>>, vector<2x128xf32>
      tpu.vector_store %arg15[%c8, %c0_83], %232 {strides = array<i32>} : memref<16x128xf32, #tpu.memory_space<vmem>>, vector<2x128xf32>,
      %234 = vector.extract_strided_slice %212 {offsets = [1, 0, 0], sizes = [1, 2, 128], strides = [1, 1, 1]} : vector<2x2x128xf32> to vector<1x2x128xf32>
      %235 = vector.shape_cast %234 : vector<1x2x128xf32> to vector<2x128xf32>
      %c10 = arith.constant 10 : index
      %c0_84 = arith.constant 0 : index
      %236 = vector.load %arg15[%c10, %c0_84] : memref<16x128xf32, #tpu.memory_space<vmem>>, vector<2x128xf32>
      tpu.vector_store %arg15[%c10, %c0_84], %235 {strides = array<i32>} : memref<16x128xf32, #tpu.memory_space<vmem>>, vector<2x128xf32>,
      %237 = vector.extract_strided_slice %216 {offsets = [1, 0, 0], sizes = [1, 2, 128], strides = [1, 1, 1]} : vector<2x2x128xf32> to vector<1x2x128xf32>
      %238 = vector.shape_cast %237 : vector<1x2x128xf32> to vector<2x128xf32>
      %c12 = arith.constant 12 : index
      %c0_85 = arith.constant 0 : index
      %239 = vector.load %arg15[%c12, %c0_85] : memref<16x128xf32, #tpu.memory_space<vmem>>, vector<2x128xf32>
      tpu.vector_store %arg15[%c12, %c0_85], %238 {strides = array<i32>} : memref<16x128xf32, #tpu.memory_space<vmem>>, vector<2x128xf32>,
      %c14 = arith.constant 14 : index
      %c0_86 = arith.constant 0 : index
      %240 = vector.load %arg15[%c14, %c0_86] : memref<16x128xf32, #tpu.memory_space<vmem>>, vector<2x128xf32>
      tpu.vector_store %arg15[%c14, %c0_86], %220 {strides = array<i32>} : memref<16x128xf32, #tpu.memory_space<vmem>>, vector<2x128xf32>,
    } else {
    }
    %c0 = arith.constant 0 : index
    %c0_1 = arith.constant 0 : index
    %c0_2 = arith.constant 0 : index
    %3 = vector.load %arg7[%c0, %c0_1, %c0_2] : memref<1x128x384xbf16, #tpu.memory_space<vmem>>, vector<1x128x384xbf16>
    %4 = vector.shape_cast %3 : vector<1x128x384xbf16> to vector<128x384xbf16>
    %c0_3 = arith.constant 0 : index
    %c0_4 = arith.constant 0 : index
    %c0_5 = arith.constant 0 : index
    %5 = vector.load %arg8[%c0_3, %c0_4, %c0_5] : memref<1x1x384xf32, #tpu.memory_space<vmem>>, vector<1x1x384xf32>
    %6 = vector.shape_cast %5 : vector<1x1x384xf32> to vector<1x384xf32>
    %c0_6 = arith.constant 0 : index
    %c0_7 = arith.constant 0 : index
    %c0_8 = arith.constant 0 : index
    %7 = vector.load %arg9[%c0_6, %c0_7, %c0_8] : memref<1x128x128xbf16, #tpu.memory_space<vmem>>, vector<1x128x128xbf16>
    %8 = vector.shape_cast %7 : vector<1x128x128xbf16> to vector<128x128xbf16>
    %c0_9 = arith.constant 0 : index
    %c0_10 = arith.constant 0 : index
    %c0_11 = arith.constant 0 : index
    %9 = vector.load %arg10[%c0_9, %c0_10, %c0_11] : memref<1x128x512xbf16, #tpu.memory_space<vmem>>, vector<1x128x512xbf16>
    %10 = vector.shape_cast %9 : vector<1x128x512xbf16> to vector<128x512xbf16>
    %c0_12 = arith.constant 0 : index
    %c0_13 = arith.constant 0 : index
    %c0_14 = arith.constant 0 : index
    %11 = vector.load %arg11[%c0_12, %c0_13, %c0_14] : memref<1x1x512xf32, #tpu.memory_space<vmem>>, vector<1x1x512xf32>
    %12 = vector.shape_cast %11 : vector<1x1x512xf32> to vector<1x512xf32>
    %c0_15 = arith.constant 0 : index
    %c0_16 = arith.constant 0 : index
    %c0_17 = arith.constant 0 : index
    %13 = vector.load %arg12[%c0_15, %c0_16, %c0_17] : memref<1x512x128xbf16, #tpu.memory_space<vmem>>, vector<1x512x128xbf16>
    %14 = vector.shape_cast %13 : vector<1x512x128xbf16> to vector<512x128xbf16>
    %c0_18 = arith.constant 0 : index
    %c0_19 = arith.constant 0 : index
    %c0_20 = arith.constant 0 : index
    %15 = vector.load %arg13[%c0_18, %c0_19, %c0_20] : memref<1x8x128xf32, #tpu.memory_space<vmem>>, vector<1x8x128xf32>
    %16 = vector.shape_cast %15 : vector<1x8x128xf32> to vector<8x128xf32>
    %17 = vector.extract_strided_slice %16 {offsets = [0, 0], sizes = [1, 128], strides = [1, 1]} : vector<8x128xf32> to vector<1x128xf32>
    %18 = vector.extract_strided_slice %16 {offsets = [1, 0], sizes = [1, 128], strides = [1, 1]} : vector<8x128xf32> to vector<1x128xf32>
    %19 = vector.extract_strided_slice %16 {offsets = [2, 0], sizes = [1, 128], strides = [1, 1]} : vector<8x128xf32> to vector<1x128xf32>
    %20 = vector.extract_strided_slice %16 {offsets = [3, 0], sizes = [1, 128], strides = [1, 1]} : vector<8x128xf32> to vector<1x128xf32>
    %21 = vector.extract_strided_slice %16 {offsets = [4, 0], sizes = [1, 128], strides = [1, 1]} : vector<8x128xf32> to vector<1x128xf32>
    %22 = vector.extract_strided_slice %16 {offsets = [5, 0], sizes = [1, 128], strides = [1, 1]} : vector<8x128xf32> to vector<1x128xf32>
    %c0_21 = arith.constant 0 : index
    %c0_22 = arith.constant 0 : index
    %23 = vector.load %arg15[%c0_21, %c0_22] : memref<16x128xf32, #tpu.memory_space<vmem>>, vector<16x128xf32>
    %24 = arith.truncf %23 : vector<16x128xf32> to vector<16x128xbf16>
    %cst = arith.constant dense<0.000000e+00> : vector<16x384xf32>
    %25 = tpu.matmul %24, %4, %cst {dimension_numbers = #tpu.dot_dimension_numbers<[1], [0], [0], [1], [0, 0, 1, 1], [], []>} : vector<16x128xbf16>, vector<128x384xbf16>, vector<16x384xf32> -> vector<16x384xf32>
    %26 = vector.broadcast %6 : vector<1x384xf32> to vector<16x384xf32>
    %27 = arith.addf %25, %26 : vector<16x384xf32>
    %28 = vector.shape_cast %27 : vector<16x384xf32> to vector<2x8x384xf32>
    %29 = tpu.iota {dimensions = array<i32: 2>} : vector<1x1x8xi32>
    %c6_i32 = arith.constant 6 : i32
    %30 = vector.broadcast %c6_i32 : i32 to vector<1x1x8xi32>
    %31 = arith.cmpi slt, %29, %30 : vector<1x1x8xi32>
    %cst_23 = arith.constant 0.000000e+00 : f32
    %cst_24 = arith.constant -1.000000e+30 : f32
    %32 = vector.broadcast %cst_23 : f32 to vector<1x1x8xf32>
    %33 = vector.broadcast %cst_24 : f32 to vector<1x1x8xf32>
    %34 = arith.select %31, %32, %33 : vector<1x1x8xi1>, vector<1x1x8xf32>
    %35 = vector.extract_strided_slice %28 {offsets = [0, 0, 0], sizes = [2, 8, 32], strides = [1, 1, 1]} : vector<2x8x384xf32> to vector<2x8x32xf32>
    %36 = arith.truncf %35 : vector<2x8x32xf32> to vector<2x8x32xbf16>
    %37 = vector.extract_strided_slice %28 {offsets = [0, 0, 128], sizes = [2, 8, 32], strides = [1, 1, 1]} : vector<2x8x384xf32> to vector<2x8x32xf32>
    %38 = arith.truncf %37 : vector<2x8x32xf32> to vector<2x8x32xbf16>
    %39 = vector.extract_strided_slice %28 {offsets = [0, 0, 256], sizes = [2, 8, 32], strides = [1, 1, 1]} : vector<2x8x384xf32> to vector<2x8x32xf32>
    %40 = arith.truncf %39 : vector<2x8x32xf32> to vector<2x8x32xbf16>
    "tpu.trace_start"() <{level = 10 : i32, message = "bqd,bkd->bqk"}> : () -> ()
    %cst_25 = arith.constant dense<0.000000e+00> : vector<2x8x8xf32>
    %41 = tpu.matmul %36, %38, %cst_25 {dimension_numbers = #tpu.dot_dimension_numbers<[2], [2], [1], [1], [0, 0, 0, 1, 1, 1], [0], [0]>} : vector<2x8x32xbf16>, vector<2x8x32xbf16>, vector<2x8x8xf32> -> vector<2x8x8xf32>
    "tpu.trace_stop"() : () -> ()
    %42 = vector.broadcast %34 : vector<1x1x8xf32> to vector<2x8x8xf32>
    %43 = arith.addf %41, %42 : vector<2x8x8xf32>
    %cst_26 = arith.constant dense<0xFF800000> : vector<2x8xf32>
    %44 = vector.multi_reduction <maximumf>, %43, %cst_26 [2] : vector<2x8x8xf32> to vector<2x8xf32>
    %45 = vector.shape_cast %44 : vector<2x8xf32> to vector<2x8x1xf32>
    %46 = vector.broadcast %45 : vector<2x8x1xf32> to vector<2x8x8xf32>
    %47 = arith.subf %43, %46 : vector<2x8x8xf32>
    %48 = math.exp %47 : vector<2x8x8xf32>
    %cst_27 = arith.constant dense<0.000000e+00> : vector<2x8xf32>
    %49 = vector.multi_reduction <add>, %48, %cst_27 [2] : vector<2x8x8xf32> to vector<2x8xf32>
    %50 = vector.shape_cast %49 : vector<2x8xf32> to vector<2x8x1xf32>
    %51 = tpu.reciprocal %50 {approx = true} : vector<2x8x1xf32> -> vector<2x8x1xf32>
    %52 = vector.broadcast %51 : vector<2x8x1xf32> to vector<2x8x8xf32>
    %53 = arith.mulf %48, %52 : vector<2x8x8xf32>
    %54 = arith.truncf %53 : vector<2x8x8xf32> to vector<2x8x8xbf16>
    "tpu.trace_start"() <{level = 10 : i32, message = "bqk,bkd->bqd"}> : () -> ()
    %cst_28 = arith.constant dense<0.000000e+00> : vector<2x8x32xf32>
    %55 = tpu.matmul %54, %40, %cst_28 {dimension_numbers = #tpu.dot_dimension_numbers<[2], [1], [1], [2], [0, 0, 0, 1, 1, 2], [0], [0]>} : vector<2x8x8xbf16>, vector<2x8x32xbf16>, vector<2x8x32xf32> -> vector<2x8x32xf32>
    "tpu.trace_stop"() : () -> ()
    %56 = vector.extract_strided_slice %28 {offsets = [0, 0, 32], sizes = [2, 8, 32], strides = [1, 1, 1]} : vector<2x8x384xf32> to vector<2x8x32xf32>
    %57 = arith.truncf %56 : vector<2x8x32xf32> to vector<2x8x32xbf16>
    %58 = vector.extract_strided_slice %28 {offsets = [0, 0, 160], sizes = [2, 8, 32], strides = [1, 1, 1]} : vector<2x8x384xf32> to vector<2x8x32xf32>
    %59 = arith.truncf %58 : vector<2x8x32xf32> to vector<2x8x32xbf16>
    %60 = vector.extract_strided_slice %28 {offsets = [0, 0, 288], sizes = [2, 8, 32], strides = [1, 1, 1]} : vector<2x8x384xf32> to vector<2x8x32xf32>
    %61 = arith.truncf %60 : vector<2x8x32xf32> to vector<2x8x32xbf16>
    "tpu.trace_start"() <{level = 10 : i32, message = "bqd,bkd->bqk"}> : () -> ()
    %cst_29 = arith.constant dense<0.000000e+00> : vector<2x8x8xf32>
    %62 = tpu.matmul %57, %59, %cst_29 {dimension_numbers = #tpu.dot_dimension_numbers<[2], [2], [1], [1], [0, 0, 0, 1, 1, 1], [0], [0]>} : vector<2x8x32xbf16>, vector<2x8x32xbf16>, vector<2x8x8xf32> -> vector<2x8x8xf32>
    "tpu.trace_stop"() : () -> ()
    %63 = vector.broadcast %34 : vector<1x1x8xf32> to vector<2x8x8xf32>
    %64 = arith.addf %62, %63 : vector<2x8x8xf32>
    %cst_30 = arith.constant dense<0xFF800000> : vector<2x8xf32>
    %65 = vector.multi_reduction <maximumf>, %64, %cst_30 [2] : vector<2x8x8xf32> to vector<2x8xf32>
    %66 = vector.shape_cast %65 : vector<2x8xf32> to vector<2x8x1xf32>
    %67 = vector.broadcast %66 : vector<2x8x1xf32> to vector<2x8x8xf32>
    %68 = arith.subf %64, %67 : vector<2x8x8xf32>
    %69 = math.exp %68 : vector<2x8x8xf32>
    %cst_31 = arith.constant dense<0.000000e+00> : vector<2x8xf32>
    %70 = vector.multi_reduction <add>, %69, %cst_31 [2] : vector<2x8x8xf32> to vector<2x8xf32>
    %71 = vector.shape_cast %70 : vector<2x8xf32> to vector<2x8x1xf32>
    %72 = tpu.reciprocal %71 {approx = true} : vector<2x8x1xf32> -> vector<2x8x1xf32>
    %73 = vector.broadcast %72 : vector<2x8x1xf32> to vector<2x8x8xf32>
    %74 = arith.mulf %69, %73 : vector<2x8x8xf32>
    %75 = arith.truncf %74 : vector<2x8x8xf32> to vector<2x8x8xbf16>
    "tpu.trace_start"() <{level = 10 : i32, message = "bqk,bkd->bqd"}> : () -> ()
    %cst_32 = arith.constant dense<0.000000e+00> : vector<2x8x32xf32>
    %76 = tpu.matmul %75, %61, %cst_32 {dimension_numbers = #tpu.dot_dimension_numbers<[2], [1], [1], [2], [0, 0, 0, 1, 1, 2], [0], [0]>} : vector<2x8x8xbf16>, vector<2x8x32xbf16>, vector<2x8x32xf32> -> vector<2x8x32xf32>
    "tpu.trace_stop"() : () -> ()
    %77 = vector.extract_strided_slice %28 {offsets = [0, 0, 64], sizes = [2, 8, 32], strides = [1, 1, 1]} : vector<2x8x384xf32> to vector<2x8x32xf32>
    %78 = arith.truncf %77 : vector<2x8x32xf32> to vector<2x8x32xbf16>
    %79 = vector.extract_strided_slice %28 {offsets = [0, 0, 192], sizes = [2, 8, 32], strides = [1, 1, 1]} : vector<2x8x384xf32> to vector<2x8x32xf32>
    %80 = arith.truncf %79 : vector<2x8x32xf32> to vector<2x8x32xbf16>
    %81 = vector.extract_strided_slice %28 {offsets = [0, 0, 320], sizes = [2, 8, 32], strides = [1, 1, 1]} : vector<2x8x384xf32> to vector<2x8x32xf32>
    %82 = arith.truncf %81 : vector<2x8x32xf32> to vector<2x8x32xbf16>
    "tpu.trace_start"() <{level = 10 : i32, message = "bqd,bkd->bqk"}> : () -> ()
    %cst_33 = arith.constant dense<0.000000e+00> : vector<2x8x8xf32>
    %83 = tpu.matmul %78, %80, %cst_33 {dimension_numbers = #tpu.dot_dimension_numbers<[2], [2], [1], [1], [0, 0, 0, 1, 1, 1], [0], [0]>} : vector<2x8x32xbf16>, vector<2x8x32xbf16>, vector<2x8x8xf32> -> vector<2x8x8xf32>
    "tpu.trace_stop"() : () -> ()
    %84 = vector.broadcast %34 : vector<1x1x8xf32> to vector<2x8x8xf32>
    %85 = arith.addf %83, %84 : vector<2x8x8xf32>
    %cst_34 = arith.constant dense<0xFF800000> : vector<2x8xf32>
    %86 = vector.multi_reduction <maximumf>, %85, %cst_34 [2] : vector<2x8x8xf32> to vector<2x8xf32>
    %87 = vector.shape_cast %86 : vector<2x8xf32> to vector<2x8x1xf32>
    %88 = vector.broadcast %87 : vector<2x8x1xf32> to vector<2x8x8xf32>
    %89 = arith.subf %85, %88 : vector<2x8x8xf32>
    %90 = math.exp %89 : vector<2x8x8xf32>
    %cst_35 = arith.constant dense<0.000000e+00> : vector<2x8xf32>
    %91 = vector.multi_reduction <add>, %90, %cst_35 [2] : vector<2x8x8xf32> to vector<2x8xf32>
    %92 = vector.shape_cast %91 : vector<2x8xf32> to vector<2x8x1xf32>
    %93 = tpu.reciprocal %92 {approx = true} : vector<2x8x1xf32> -> vector<2x8x1xf32>
    %94 = vector.broadcast %93 : vector<2x8x1xf32> to vector<2x8x8xf32>
    %95 = arith.mulf %90, %94 : vector<2x8x8xf32>
    %96 = arith.truncf %95 : vector<2x8x8xf32> to vector<2x8x8xbf16>
    "tpu.trace_start"() <{level = 10 : i32, message = "bqk,bkd->bqd"}> : () -> ()
    %cst_36 = arith.constant dense<0.000000e+00> : vector<2x8x32xf32>
    %97 = tpu.matmul %96, %82, %cst_36 {dimension_numbers = #tpu.dot_dimension_numbers<[2], [1], [1], [2], [0, 0, 0, 1, 1, 2], [0], [0]>} : vector<2x8x8xbf16>, vector<2x8x32xbf16>, vector<2x8x32xf32> -> vector<2x8x32xf32>
    "tpu.trace_stop"() : () -> ()
    %98 = vector.extract_strided_slice %28 {offsets = [0, 0, 96], sizes = [2, 8, 32], strides = [1, 1, 1]} : vector<2x8x384xf32> to vector<2x8x32xf32>
    %99 = arith.truncf %98 : vector<2x8x32xf32> to vector<2x8x32xbf16>
    %100 = vector.extract_strided_slice %28 {offsets = [0, 0, 224], sizes = [2, 8, 32], strides = [1, 1, 1]} : vector<2x8x384xf32> to vector<2x8x32xf32>
    %101 = arith.truncf %100 : vector<2x8x32xf32> to vector<2x8x32xbf16>
    %102 = vector.extract_strided_slice %28 {offsets = [0, 0, 352], sizes = [2, 8, 32], strides = [1, 1, 1]} : vector<2x8x384xf32> to vector<2x8x32xf32>
    %103 = arith.truncf %102 : vector<2x8x32xf32> to vector<2x8x32xbf16>
    "tpu.trace_start"() <{level = 10 : i32, message = "bqd,bkd->bqk"}> : () -> ()
    %cst_37 = arith.constant dense<0.000000e+00> : vector<2x8x8xf32>
    %104 = tpu.matmul %99, %101, %cst_37 {dimension_numbers = #tpu.dot_dimension_numbers<[2], [2], [1], [1], [0, 0, 0, 1, 1, 1], [0], [0]>} : vector<2x8x32xbf16>, vector<2x8x32xbf16>, vector<2x8x8xf32> -> vector<2x8x8xf32>
    "tpu.trace_stop"() : () -> ()
    %105 = vector.broadcast %34 : vector<1x1x8xf32> to vector<2x8x8xf32>
    %106 = arith.addf %104, %105 : vector<2x8x8xf32>
    %cst_38 = arith.constant dense<0xFF800000> : vector<2x8xf32>
    %107 = vector.multi_reduction <maximumf>, %106, %cst_38 [2] : vector<2x8x8xf32> to vector<2x8xf32>
    %108 = vector.shape_cast %107 : vector<2x8xf32> to vector<2x8x1xf32>
    %109 = vector.broadcast %108 : vector<2x8x1xf32> to vector<2x8x8xf32>
    %110 = arith.subf %106, %109 : vector<2x8x8xf32>
    %111 = math.exp %110 : vector<2x8x8xf32>
    %cst_39 = arith.constant dense<0.000000e+00> : vector<2x8xf32>
    %112 = vector.multi_reduction <add>, %111, %cst_39 [2] : vector<2x8x8xf32> to vector<2x8xf32>
    %113 = vector.shape_cast %112 : vector<2x8xf32> to vector<2x8x1xf32>
    %114 = tpu.reciprocal %113 {approx = true} : vector<2x8x1xf32> -> vector<2x8x1xf32>
    %115 = vector.broadcast %114 : vector<2x8x1xf32> to vector<2x8x8xf32>
    %116 = arith.mulf %111, %115 : vector<2x8x8xf32>
    %117 = arith.truncf %116 : vector<2x8x8xf32> to vector<2x8x8xbf16>
    "tpu.trace_start"() <{level = 10 : i32, message = "bqk,bkd->bqd"}> : () -> ()
    %cst_40 = arith.constant dense<0.000000e+00> : vector<2x8x32xf32>
    %118 = tpu.matmul %117, %103, %cst_40 {dimension_numbers = #tpu.dot_dimension_numbers<[2], [1], [1], [2], [0, 0, 0, 1, 1, 2], [0], [0]>} : vector<2x8x8xbf16>, vector<2x8x32xbf16>, vector<2x8x32xf32> -> vector<2x8x32xf32>
    "tpu.trace_stop"() : () -> ()
    %119 = tpu.concatenate %55, %76, %97, %118 in 2 : vector<2x8x32xf32>, vector<2x8x32xf32>, vector<2x8x32xf32>, vector<2x8x32xf32> -> vector<2x8x128xf32>
    %120 = vector.shape_cast %119 : vector<2x8x128xf32> to vector<16x128xf32>
    %121 = arith.truncf %120 : vector<16x128xf32> to vector<16x128xbf16>
    %cst_41 = arith.constant dense<0.000000e+00> : vector<16x128xf32>
    %122 = tpu.matmul %121, %8, %cst_41 {dimension_numbers = #tpu.dot_dimension_numbers<[1], [0], [0], [1], [0, 0, 1, 1], [], []>} : vector<16x128xbf16>, vector<128x128xbf16>, vector<16x128xf32> -> vector<16x128xf32>
    %123 = vector.broadcast %17 : vector<1x128xf32> to vector<16x128xf32>
    %124 = arith.addf %122, %123 : vector<16x128xf32>
    %125 = arith.addf %23, %124 : vector<16x128xf32>
    %cst_42 = arith.constant dense<0.000000e+00> : vector<16xf32>
    %126 = vector.multi_reduction <add>, %125, %cst_42 [1] : vector<16x128xf32> to vector<16xf32>
    %127 = vector.shape_cast %126 : vector<16xf32> to vector<16x1xf32>
    %cst_43 = arith.constant 1.280000e+02 : f32
    %128 = vector.broadcast %cst_43 : f32 to vector<16x1xf32>
    %129 = arith.divf %127, %128 : vector<16x1xf32>
    %130 = vector.broadcast %129 : vector<16x1xf32> to vector<16x128xf32>
    %131 = arith.subf %125, %130 : vector<16x128xf32>
    %132 = vector.broadcast %129 : vector<16x1xf32> to vector<16x128xf32>
    %133 = arith.subf %125, %132 : vector<16x128xf32>
    %134 = arith.mulf %131, %133 : vector<16x128xf32>
    %cst_44 = arith.constant dense<0.000000e+00> : vector<16xf32>
    %135 = vector.multi_reduction <add>, %134, %cst_44 [1] : vector<16x128xf32> to vector<16xf32>
    %136 = vector.shape_cast %135 : vector<16xf32> to vector<16x1xf32>
    %cst_45 = arith.constant 1.280000e+02 : f32
    %137 = vector.broadcast %cst_45 : f32 to vector<16x1xf32>
    %138 = arith.divf %136, %137 : vector<16x1xf32>
    %139 = vector.broadcast %129 : vector<16x1xf32> to vector<16x128xf32>
    %140 = arith.subf %125, %139 : vector<16x128xf32>
    %cst_46 = arith.constant 9.99999974E-6 : f32
    %141 = vector.broadcast %cst_46 : f32 to vector<16x1xf32>
    %142 = arith.addf %138, %141 : vector<16x1xf32>
    %143 = math.rsqrt %142 : vector<16x1xf32>
    %144 = vector.broadcast %143 : vector<16x1xf32> to vector<16x128xf32>
    %145 = arith.mulf %140, %144 : vector<16x128xf32>
    %146 = vector.broadcast %19 : vector<1x128xf32> to vector<16x128xf32>
    %147 = arith.mulf %145, %146 : vector<16x128xf32>
    %148 = vector.broadcast %20 : vector<1x128xf32> to vector<16x128xf32>
    %149 = arith.addf %147, %148 : vector<16x128xf32>
    %150 = arith.truncf %149 : vector<16x128xf32> to vector<16x128xbf16>
    %cst_47 = arith.constant dense<0.000000e+00> : vector<16x512xf32>
    %151 = tpu.matmul %150, %10, %cst_47 {dimension_numbers = #tpu.dot_dimension_numbers<[1], [0], [0], [1], [0, 0, 1, 1], [], []>} : vector<16x128xbf16>, vector<128x512xbf16>, vector<16x512xf32> -> vector<16x512xf32>
    %152 = vector.broadcast %12 : vector<1x512xf32> to vector<16x512xf32>
    %153 = arith.addf %151, %152 : vector<16x512xf32>
    %154 = arith.mulf %153, %153 : vector<16x512xf32>
    %155 = arith.mulf %153, %154 : vector<16x512xf32>
    %cst_48 = arith.constant 4.471500e-02 : f32
    %156 = vector.broadcast %cst_48 : f32 to vector<16x512xf32>
    %157 = arith.mulf %156, %155 : vector<16x512xf32>
    %158 = arith.addf %153, %157 : vector<16x512xf32>
    %cst_49 = arith.constant 0.797884583 : f32
    %159 = vector.broadcast %cst_49 : f32 to vector<16x512xf32>
    %160 = arith.mulf %159, %158 : vector<16x512xf32>
    %161 = math.tanh %160 : vector<16x512xf32>
    %cst_50 = arith.constant 1.000000e+00 : f32
    %162 = vector.broadcast %cst_50 : f32 to vector<16x512xf32>
    %163 = arith.addf %162, %161 : vector<16x512xf32>
    %cst_51 = arith.constant 5.000000e-01 : f32
    %164 = vector.broadcast %cst_51 : f32 to vector<16x512xf32>
    %165 = arith.mulf %164, %163 : vector<16x512xf32>
    %166 = arith.mulf %153, %165 : vector<16x512xf32>
    %167 = arith.truncf %166 : vector<16x512xf32> to vector<16x512xbf16>
    %cst_52 = arith.constant dense<0.000000e+00> : vector<16x128xf32>
    %168 = tpu.matmul %167, %14, %cst_52 {dimension_numbers = #tpu.dot_dimension_numbers<[1], [0], [0], [1], [0, 0, 1, 1], [], []>} : vector<16x512xbf16>, vector<512x128xbf16>, vector<16x128xf32> -> vector<16x128xf32>
    %169 = vector.broadcast %18 : vector<1x128xf32> to vector<16x128xf32>
    %170 = arith.addf %168, %169 : vector<16x128xf32>
    %171 = arith.addf %149, %170 : vector<16x128xf32>
    %cst_53 = arith.constant dense<0.000000e+00> : vector<16xf32>
    %172 = vector.multi_reduction <add>, %171, %cst_53 [1] : vector<16x128xf32> to vector<16xf32>
    %173 = vector.shape_cast %172 : vector<16xf32> to vector<16x1xf32>
    %cst_54 = arith.constant 1.280000e+02 : f32
    %174 = vector.broadcast %cst_54 : f32 to vector<16x1xf32>
    %175 = arith.divf %173, %174 : vector<16x1xf32>
    %176 = vector.broadcast %175 : vector<16x1xf32> to vector<16x128xf32>
    %177 = arith.subf %171, %176 : vector<16x128xf32>
    %178 = vector.broadcast %175 : vector<16x1xf32> to vector<16x128xf32>
    %179 = arith.subf %171, %178 : vector<16x128xf32>
    %180 = arith.mulf %177, %179 : vector<16x128xf32>
    %cst_55 = arith.constant dense<0.000000e+00> : vector<16xf32>
    %181 = vector.multi_reduction <add>, %180, %cst_55 [1] : vector<16x128xf32> to vector<16xf32>
    %182 = vector.shape_cast %181 : vector<16xf32> to vector<16x1xf32>
    %cst_56 = arith.constant 1.280000e+02 : f32
    %183 = vector.broadcast %cst_56 : f32 to vector<16x1xf32>
    %184 = arith.divf %182, %183 : vector<16x1xf32>
    %185 = vector.broadcast %175 : vector<16x1xf32> to vector<16x128xf32>
    %186 = arith.subf %171, %185 : vector<16x128xf32>
    %cst_57 = arith.constant 9.99999974E-6 : f32
    %187 = vector.broadcast %cst_57 : f32 to vector<16x1xf32>
    %188 = arith.addf %184, %187 : vector<16x1xf32>
    %189 = math.rsqrt %188 : vector<16x1xf32>
    %190 = vector.broadcast %189 : vector<16x1xf32> to vector<16x128xf32>
    %191 = arith.mulf %186, %190 : vector<16x128xf32>
    %192 = vector.broadcast %21 : vector<1x128xf32> to vector<16x128xf32>
    %193 = arith.mulf %191, %192 : vector<16x128xf32>
    %194 = vector.broadcast %22 : vector<1x128xf32> to vector<16x128xf32>
    %195 = arith.addf %193, %194 : vector<16x128xf32>
    %c0_58 = arith.constant 0 : index
    %c0_59 = arith.constant 0 : index
    %196 = vector.load %arg15[%c0_58, %c0_59] : memref<16x128xf32, #tpu.memory_space<vmem>>, vector<16x128xf32>
    tpu.vector_store %arg15[%c0_58, %c0_59], %195 {strides = array<i32>} : memref<16x128xf32, #tpu.memory_space<vmem>>, vector<16x128xf32>,
    %c1_i32 = arith.constant 1 : i32
    %197 = arith.cmpi eq, %arg0, %c1_i32 : i32
    %198 = arith.extui %197 : i1 to i32
    %c0_i32_60 = arith.constant 0 : i32
    %199 = arith.cmpi ne, %198, %c0_i32_60 : i32
    scf.if %199 {
      %200 = vector.extract_strided_slice %195 {offsets = [0, 0], sizes = [1, 128], strides = [1, 1]} : vector<16x128xf32> to vector<1x128xf32>
      %201 = vector.extract_strided_slice %195 {offsets = [8, 0], sizes = [1, 128], strides = [1, 1]} : vector<16x128xf32> to vector<1x128xf32>
      %202 = tpu.concatenate %200, %201 in 0 : vector<1x128xf32>, vector<1x128xf32> -> vector<2x128xf32>
      %203 = vector.extract_strided_slice %16 {offsets = [6, 0], sizes = [1, 128], strides = [1, 1]} : vector<8x128xf32> to vector<1x128xf32>
      %204 = vector.extract_strided_slice %16 {offsets = [7, 0], sizes = [1, 128], strides = [1, 1]} : vector<8x128xf32> to vector<1x128xf32>
      %cst_61 = arith.constant dense<0.000000e+00> : vector<2xf32>
      %205 = vector.multi_reduction <add>, %202, %cst_61 [1] : vector<2x128xf32> to vector<2xf32>
      %206 = vector.shape_cast %205 : vector<2xf32> to vector<2x1xf32>
      %cst_62 = arith.constant 1.280000e+02 : f32
      %207 = vector.broadcast %cst_62 : f32 to vector<2x1xf32>
      %208 = arith.divf %206, %207 : vector<2x1xf32>
      %209 = vector.broadcast %208 : vector<2x1xf32> to vector<2x128xf32>
      %210 = arith.subf %202, %209 : vector<2x128xf32>
      %211 = vector.broadcast %208 : vector<2x1xf32> to vector<2x128xf32>
      %212 = arith.subf %202, %211 : vector<2x128xf32>
      %213 = arith.mulf %210, %212 : vector<2x128xf32>
      %cst_63 = arith.constant dense<0.000000e+00> : vector<2xf32>
      %214 = vector.multi_reduction <add>, %213, %cst_63 [1] : vector<2x128xf32> to vector<2xf32>
      %215 = vector.shape_cast %214 : vector<2xf32> to vector<2x1xf32>
      %cst_64 = arith.constant 1.280000e+02 : f32
      %216 = vector.broadcast %cst_64 : f32 to vector<2x1xf32>
      %217 = arith.divf %215, %216 : vector<2x1xf32>
      %218 = vector.broadcast %208 : vector<2x1xf32> to vector<2x128xf32>
      %219 = arith.subf %202, %218 : vector<2x128xf32>
      %cst_65 = arith.constant 9.99999974E-6 : f32
      %220 = vector.broadcast %cst_65 : f32 to vector<2x1xf32>
      %221 = arith.addf %217, %220 : vector<2x1xf32>
      %222 = math.rsqrt %221 : vector<2x1xf32>
      %223 = vector.broadcast %222 : vector<2x1xf32> to vector<2x128xf32>
      %224 = arith.mulf %219, %223 : vector<2x128xf32>
      %225 = vector.broadcast %203 : vector<1x128xf32> to vector<2x128xf32>
      %226 = arith.mulf %224, %225 : vector<2x128xf32>
      %227 = vector.broadcast %204 : vector<1x128xf32> to vector<2x128xf32>
      %228 = arith.addf %226, %227 : vector<2x128xf32>
      %c0_66 = arith.constant 0 : index
      %c0_67 = arith.constant 0 : index
      %229 = vector.load %arg14[%c0_66, %c0_67] : memref<2x128xf32, #tpu.memory_space<vmem>>, vector<2x128xf32>
      tpu.vector_store %arg14[%c0_66, %c0_67], %228 {strides = array<i32>} : memref<2x128xf32, #tpu.memory_space<vmem>>, vector<2x128xf32>,
    } else {
    }
    return
  }
  func.func @transform_0(%arg0: i32) -> (i32, i32, i32) {
    %c0_i32 = arith.constant 0 : i32
    %c0_i32_0 = arith.constant 0 : i32
    %c0_i32_1 = arith.constant 0 : i32
    %c0_i32_2 = arith.constant 0 : i32
    return %c0_i32, %c0_i32_0, %c0_i32_1 : i32, i32, i32
  }
  func.func @transform_1(%arg0: i32) -> (i32, i32, i32) {
    %c0_i32 = arith.constant 0 : i32
    %c0_i32_0 = arith.constant 0 : i32
    %c0_i32_1 = arith.constant 0 : i32
    %c0_i32_2 = arith.constant 0 : i32
    return %c0_i32, %c0_i32_0, %c0_i32_1 : i32, i32, i32
  }
  func.func @transform_2(%arg0: i32) -> (i32, i32) {
    %c0_i32 = arith.constant 0 : i32
    %c0_i32_0 = arith.constant 0 : i32
    %c0_i32_1 = arith.constant 0 : i32
    return %c0_i32, %c0_i32_0 : i32, i32
  }
  func.func @transform_3(%arg0: i32) -> (i32, i32) {
    %c0_i32 = arith.constant 0 : i32
    %c0_i32_0 = arith.constant 0 : i32
    %c0_i32_1 = arith.constant 0 : i32
    return %c0_i32, %c0_i32_0 : i32, i32
  }
  func.func @transform_4(%arg0: i32) -> (i32, i32) {
    %c0_i32 = arith.constant 0 : i32
    %c0_i32_0 = arith.constant 0 : i32
    %c0_i32_1 = arith.constant 0 : i32
    return %c0_i32, %c0_i32_0 : i32, i32
  }
  func.func @transform_5(%arg0: i32) -> (i32, i32) {
    %c0_i32 = arith.constant 0 : i32
    %c0_i32_0 = arith.constant 0 : i32
    %c0_i32_1 = arith.constant 0 : i32
    return %c0_i32, %c0_i32_0 : i32, i32
  }
  func.func @transform_6(%arg0: i32) -> (i32, i32, i32) {
    %c0_i32 = arith.constant 0 : i32
    %c0_i32_0 = arith.constant 0 : i32
    %c0_i32_1 = arith.constant 0 : i32
    return %arg0, %c0_i32, %c0_i32_0 : i32, i32, i32
  }
  func.func @transform_7(%arg0: i32) -> (i32, i32, i32) {
    %c0_i32 = arith.constant 0 : i32
    %c0_i32_0 = arith.constant 0 : i32
    %c0_i32_1 = arith.constant 0 : i32
    return %arg0, %c0_i32, %c0_i32_0 : i32, i32, i32
  }
  func.func @transform_8(%arg0: i32) -> (i32, i32, i32) {
    %c0_i32 = arith.constant 0 : i32
    %c0_i32_0 = arith.constant 0 : i32
    %c0_i32_1 = arith.constant 0 : i32
    return %arg0, %c0_i32, %c0_i32_0 : i32, i32, i32
  }
  func.func @transform_9(%arg0: i32) -> (i32, i32, i32) {
    %c0_i32 = arith.constant 0 : i32
    %c0_i32_0 = arith.constant 0 : i32
    %c0_i32_1 = arith.constant 0 : i32
    return %arg0, %c0_i32, %c0_i32_0 : i32, i32, i32
  }
  func.func @transform_10(%arg0: i32) -> (i32, i32, i32) {
    %c0_i32 = arith.constant 0 : i32
    %c0_i32_0 = arith.constant 0 : i32
    %c0_i32_1 = arith.constant 0 : i32
    return %arg0, %c0_i32, %c0_i32_0 : i32, i32, i32
  }
  func.func @transform_11(%arg0: i32) -> (i32, i32, i32) {
    %c0_i32 = arith.constant 0 : i32
    %c0_i32_0 = arith.constant 0 : i32
    %c0_i32_1 = arith.constant 0 : i32
    return %arg0, %c0_i32, %c0_i32_0 : i32, i32, i32
  }
  func.func @transform_12(%arg0: i32) -> (i32, i32, i32) {
    %c0_i32 = arith.constant 0 : i32
    %c0_i32_0 = arith.constant 0 : i32
    %c0_i32_1 = arith.constant 0 : i32
    return %arg0, %c0_i32, %c0_i32_0 : i32, i32, i32
  }
  func.func @transform_13(%arg0: i32) -> (i32, i32) {
    %c0_i32 = arith.constant 0 : i32
    %c0_i32_0 = arith.constant 0 : i32
    %c0_i32_1 = arith.constant 0 : i32
    return %c0_i32, %c0_i32_0 : i32, i32
  }
}

</mosaic_0001>

<llo_original>
// kernel: dsvit_forward.1
$region0: #{dsvit_forward.1}
  #allocation0 [shape = 'u32[]', space=smem, size = 0x4, offset = 0x4, fixed_abs, tag = 'smem constant byte address 0x4 - core index']
  #allocation1 [shape = 'u32[72,128]{1,0:T(1,128)}', space=vmem, size = 0x9000, scoped, tag = 'internal scratch']
  #allocation2 [shape = 'f32[16,128]{1,0:T(8,128)}', space=vmem, size = 0x2000, scoped, tag = 'scratch operand']
  %s0 = inlined_call_operand.vmem [shape: f32[2,2,32], index: 0, kind: input, shape index: {}]
  %s1 = inlined_call_operand.vmem [shape: f32[2,2,32], index: 1, kind: input, shape index: {}]
  %s2 = inlined_call_operand.vmem [shape: bf16[32,128], index: 2, kind: input, shape index: {}]
  %s3 = inlined_call_operand.vmem [shape: bf16[32,128], index: 3, kind: input, shape index: {}]
  %s4 = inlined_call_operand.vmem [shape: f32[1,128], index: 4, kind: input, shape index: {}]
  %s5 = inlined_call_operand.vmem [shape: f32[17,128], index: 5, kind: input, shape index: {}]
  %s6 = inlined_call_operand.hbm [shape: bf16[2,128,384], index: 6, kind: input, shape index: {}]
  %s7 = inlined_call_operand.vmem [shape: f32[2,1,384], index: 7, kind: input, shape index: {}]
  %s8 = inlined_call_operand.hbm [shape: bf16[2,128,128], index: 8, kind: input, shape index: {}]
  %s9 = inlined_call_operand.hbm [shape: bf16[2,128,512], index: 9, kind: input, shape index: {}]
  %s10 = inlined_call_operand.vmem [shape: f32[2,1,512], index: 10, kind: input, shape index: {}]
  %s11 = inlined_call_operand.hbm [shape: bf16[2,512,128], index: 11, kind: input, shape index: {}]
  %s12 = inlined_call_operand.vmem [shape: f32[2,8,128], index: 12, kind: input, shape index: {}]
  %s13 = inlined_call_operand.hbm [shape: f32[2,128], index: 13, kind: output, shape index: {}]
  %s14 = sld [smem:[#allocation0]]
  $region109: #{dsvit_forward.1} parent=0
    _
  %s16 = ssub.s32 1, %s14
  %s17 = scalar_select 0, %s16, %s14
  $region1: #{dsvit_forward.1} parent=0
    #allocation3 [shape = 'u8[196608]{0}', space=vmem, size = 0x30000, scoped, tag = 'input window, operand 6']
    #allocation4 [shape = 's32[2]{0}', space=sflag, size = 0x8, scoped, tag = 'scoped memory for dsvit_forward.1']
    #allocation5 [shape = 's32[2]{0}', space=sflag, size = 0x8, scoped, tag = 'scoped memory for dsvit_forward.1']
    #allocation6 [shape = 'u8[65536]{0}', space=vmem, size = 0x10000, scoped, tag = 'input window, operand 8']
    #allocation7 [shape = 's32[2]{0}', space=sflag, size = 0x8, scoped, tag = 'scoped memory for dsvit_forward.1']
    #allocation8 [shape = 'u8[262144]{0}', space=vmem, size = 0x40000, scoped, tag = 'input window, operand 9']
    #allocation9 [shape = 'u8[262144]{0}', space=vmem, size = 0x40000, scoped, tag = 'input window, operand 11']
    #allocation10 [shape = 's32[2]{0}', space=sflag, size = 0x8, scoped, tag = 'scoped memory for dsvit_forward.1']
    #allocation11 [shape = 'u8[1024]{0}', space=vmem, size = 0x400, scoped, tag = 'output window, operand 0, single buffered']
    %18 = vsyncpa [#allocation4], 0
    %s19 = scalar_lea.sflag [#allocation4], 1
    %20 = vsyncpa %s19, 0
    %21 = vsyncpa [#allocation7], 0
    %s22 = scalar_lea.sflag [#allocation7], 1
    %23 = vsyncpa %s22, 0
    %24 = vsyncpa [#allocation10], 0
    %s25 = scalar_lea.sflag [#allocation10], 1
    %26 = vsyncpa %s25, 0
    %27 = vsyncpa [#allocation5], 0
    loop: start=0, step=1, limit=4
    $region2: #{dsvit_forward.1} parent=1 // loop_pre_header
      _
    $region3: #{dsvit_forward.1} parent=1 // loop_header
      %s29 = sphi 0, %s33
      %p30 = scmp.ge.s32.totalorder %s29, 4
      %s37 = sphi 0, %s37
      %s39 = sphi 0, %s37
      %s40 = sphi 0, %s39
      %s54 = sphi 0, %s40
      %s58 = sphi 0, %s58
      %s60 = sphi 0, %s58
      %s61 = sphi 0, %s60
      %s75 = sphi 0, %s61
      %s79 = sphi 0, %s79
      %s81 = sphi 0, %s79
      %s82 = sphi 0, %s81
      %s96 = sphi 0, %s82
      %s100 = sphi 0, %s100
      %s102 = sphi 0, %s100
      %s103 = sphi 0, %s102
      %s117 = sphi 0, %s103
      %s121 = sphi 0, %s121
      %s123 = sphi 0, %s121
      %s124 = sphi 0, %s123
      %s138 = sphi 0, %s124
      %s142 = sphi 0, %s142
      %s144 = sphi 0, %s142
      %s145 = sphi 0, %s144
      %s159 = sphi 0, %s145
      %s165 = sphi 0, %s167
      %s168 = sphi 0, %s165
      %s169 = sphi 0, %s168
      %s185 = sphi 0, %s169
      %s191 = sphi 0, %s193
      %s194 = sphi 0, %s191
      %s195 = sphi 0, %s194
      %s211 = sphi 0, %s195
      %s217 = sphi 0, %s219
      %s220 = sphi 0, %s217
      %s221 = sphi 0, %s220
      %s237 = sphi 0, %s221
      %s243 = sphi 0, %s245
      %s246 = sphi 0, %s243
      %s247 = sphi 0, %s246
      %s263 = sphi 0, %s247
      %s269 = sphi 0, %s271
      %s272 = sphi 0, %s269
      %s273 = sphi 0, %s272
      %s289 = sphi 0, %s273
      %s295 = sphi 0, %s297
      %s298 = sphi 0, %s295
      %s299 = sphi 0, %s298
      %s315 = sphi 0, %s299
      %s321 = sphi 0, %s323
      %s324 = sphi 0, %s321
      %s325 = sphi 0, %s324
      %s341 = sphi 0, %s325
      %s345 = sphi 0, %s345
      %s347 = sphi 0, %s345
      %s348 = sphi 0, %s347
      %s362 = sphi 0, %s348
    $region4: #{dsvit_forward.1} parent=1 // loop_header_branch
      %32 = sbr.rel (%p30) target = $region8
    $region5: #{dsvit_forward.1} parent=1 // loop_body
      %s34 = ssub.s32 %s29, 1
      %s35 = ssub.s32 %s29, 2
      %s36 = sadd.s32 %s29, 1
      %s38 = sadd.s32 %s37, 1
      %p41 = scmp.eq.s32.totalorder %s29, 1
      %p42 = scmp.ne.s32.totalorder %s37, %s39
      %p43 = scmp.eq.s32.totalorder %s29, 0
      %p44 = por %p42, %p43
      %p45 = scmp.ne.s32.totalorder %s37, %s39
      %p46 = scmp.eq.s32.totalorder %s34, 1
      %p47 = por %p45, %p46
      %p48 = scmp.ne.s32.totalorder %s39, %s40
      %p49 = scmp.eq.s32.totalorder %s34, 0
      %p50 = por %p48, %p49
      %p51 = scmp.ne.s32.totalorder %s39, %s40
      %p52 = scmp.eq.s32.totalorder %s35, 1
      %p53 = por %p51, %p52
      %p55 = scmp.ne.s32.totalorder %s40, %s54
      %p56 = scmp.eq.s32.totalorder %s35, 0
      %p57 = por %p55, %p56
      %s59 = sadd.s32 %s58, 1
      %p62 = scmp.eq.s32.totalorder %s29, 1
      %p63 = scmp.ne.s32.totalorder %s58, %s60
      %p64 = scmp.eq.s32.totalorder %s29, 0
      %p65 = por %p63, %p64
      %p66 = scmp.ne.s32.totalorder %s58, %s60
      %p67 = scmp.eq.s32.totalorder %s34, 1
      %p68 = por %p66, %p67
      %p69 = scmp.ne.s32.totalorder %s60, %s61
      %p70 = scmp.eq.s32.totalorder %s34, 0
      %p71 = por %p69, %p70
      %p72 = scmp.ne.s32.totalorder %s60, %s61
      %p73 = scmp.eq.s32.totalorder %s35, 1
      %p74 = por %p72, %p73
      %p76 = scmp.ne.s32.totalorder %s61, %s75
      %p77 = scmp.eq.s32.totalorder %s35, 0
      %p78 = por %p76, %p77
      %s80 = sadd.s32 %s79, 1
      %p83 = scmp.eq.s32.totalorder %s29, 1
      %p84 = scmp.ne.s32.totalorder %s79, %s81
      %p85 = scmp.eq.s32.totalorder %s29, 0
      %p86 = por %p84, %p85
      %p87 = scmp.ne.s32.totalorder %s79, %s81
      %p88 = scmp.eq.s32.totalorder %s34, 1
      %p89 = por %p87, %p88
      %p90 = scmp.ne.s32.totalorder %s81, %s82
      %p91 = scmp.eq.s32.totalorder %s34, 0
      %p92 = por %p90, %p91
      %p93 = scmp.ne.s32.totalorder %s81, %s82
      %p94 = scmp.eq.s32.totalorder %s35, 1
      %p95 = por %p93, %p94
      %p97 = scmp.ne.s32.totalorder %s82, %s96
      %p98 = scmp.eq.s32.totalorder %s35, 0
      %p99 = por %p97, %p98
      %s101 = sadd.s32 %s100, 1
      %p104 = scmp.eq.s32.totalorder %s29, 1
      %p105 = scmp.ne.s32.totalorder %s100, %s102
      %p106 = scmp.eq.s32.totalorder %s29, 0
      %p107 = por %p105, %p106
      %p108 = scmp.ne.s32.totalorder %s100, %s102
      %p109 = scmp.eq.s32.totalorder %s34, 1
      %p110 = por %p108, %p109
      %p111 = scmp.ne.s32.totalorder %s102, %s103
      %p112 = scmp.eq.s32.totalorder %s34, 0
      %p113 = por %p111, %p112
      %p114 = scmp.ne.s32.totalorder %s102, %s103
      %p115 = scmp.eq.s32.totalorder %s35, 1
      %p116 = por %p114, %p115
      %p118 = scmp.ne.s32.totalorder %s103, %s117
      %p119 = scmp.eq.s32.totalorder %s35, 0
      %p120 = por %p118, %p119
      %s122 = sadd.s32 %s121, 1
      %p125 = scmp.eq.s32.totalorder %s29, 1
      %p126 = scmp.ne.s32.totalorder %s121, %s123
      %p127 = scmp.eq.s32.totalorder %s29, 0
      %p128 = por %p126, %p127
      %p129 = scmp.ne.s32.totalorder %s121, %s123
      %p130 = scmp.eq.s32.totalorder %s34, 1
      %p131 = por %p129, %p130
      %p132 = scmp.ne.s32.totalorder %s123, %s124
      %p133 = scmp.eq.s32.totalorder %s34, 0
      %p134 = por %p132, %p133
      %p135 = scmp.ne.s32.totalorder %s123, %s124
      %p136 = scmp.eq.s32.totalorder %s35, 1
      %p137 = por %p135, %p136
      %p139 = scmp.ne.s32.totalorder %s124, %s138
      %p140 = scmp.eq.s32.totalorder %s35, 0
      %p141 = por %p139, %p140
      %s143 = sadd.s32 %s142, 1
      %p146 = scmp.eq.s32.totalorder %s29, 1
      %p147 = scmp.ne.s32.totalorder %s142, %s144
      %p148 = scmp.eq.s32.totalorder %s29, 0
      %p149 = por %p147, %p148
      %p150 = scmp.ne.s32.totalorder %s142, %s144
      %p151 = scmp.eq.s32.totalorder %s34, 1
      %p152 = por %p150, %p151
      %p153 = scmp.ne.s32.totalorder %s144, %s145
      %p154 = scmp.eq.s32.totalorder %s34, 0
      %p155 = por %p153, %p154
      %p156 = scmp.ne.s32.totalorder %s144, %s145
      %p157 = scmp.eq.s32.totalorder %s35, 1
      %p158 = por %p156, %p157
      %p160 = scmp.ne.s32.totalorder %s145, %s159
      %p161 = scmp.eq.s32.totalorder %s35, 0
      %p162 = por %p160, %p161
      %s163 = ssub.s32 %s29, %s36
      %p164 = scmp.eq.s32.totalorder %s163, 0
      %s166 = sadd.s32 %s165, 1
      %s167 = scalar_select %p164, %s165, %s166
      %p170 = pneg %p164
      %p171 = scmp.eq.s32.totalorder %s29, 1
      %p172 = por %p170, %p171
      %p173 = scmp.ne.s32.totalorder %s165, %s168
      %p174 = scmp.eq.s32.totalorder %s29, 0
      %p175 = por %p173, %p174
      %p176 = scmp.ne.s32.totalorder %s165, %s168
      %p177 = scmp.eq.s32.totalorder %s34, 1
      %p178 = por %p176, %p177
      %p179 = scmp.ne.s32.totalorder %s168, %s169
      %p180 = scmp.eq.s32.totalorder %s34, 0
      %p181 = por %p179, %p180
      %p182 = scmp.ne.s32.totalorder %s168, %s169
      %p183 = scmp.eq.s32.totalorder %s35, 1
      %p184 = por %p182, %p183
      %p186 = scmp.ne.s32.totalorder %s169, %s185
      %p187 = scmp.eq.s32.totalorder %s35, 0
      %p188 = por %p186, %p187
      %s189 = ssub.s32 %s29, %s36
      %p190 = scmp.eq.s32.totalorder %s189, 0
      %s192 = sadd.s32 %s191, 1
      %s193 = scalar_select %p190, %s191, %s192
      %p196 = pneg %p190
      %p197 = scmp.eq.s32.totalorder %s29, 1
      %p198 = por %p196, %p197
      %p199 = scmp.ne.s32.totalorder %s191, %s194
      %p200 = scmp.eq.s32.totalorder %s29, 0
      %p201 = por %p199, %p200
      %p202 = scmp.ne.s32.totalorder %s191, %s194
      %p203 = scmp.eq.s32.totalorder %s34, 1
      %p204 = por %p202, %p203
      %p205 = scmp.ne.s32.totalorder %s194, %s195
      %p206 = scmp.eq.s32.totalorder %s34, 0
      %p207 = por %p205, %p206
      %p208 = scmp.ne.s32.totalorder %s194, %s195
      %p209 = scmp.eq.s32.totalorder %s35, 1
      %p210 = por %p208, %p209
      %p212 = scmp.ne.s32.totalorder %s195, %s211
      %p213 = scmp.eq.s32.totalorder %s35, 0
      %p214 = por %p212, %p213
      %s215 = ssub.s32 %s29, %s36
      %p216 = scmp.eq.s32.totalorder %s215, 0
      %s218 = sadd.s32 %s217, 1
      %s219 = scalar_select %p216, %s217, %s218
      %p222 = pneg %p216
      %p223 = scmp.eq.s32.totalorder %s29, 1
      %p224 = por %p222, %p223
      %p225 = scmp.ne.s32.totalorder %s217, %s220
      %p226 = scmp.eq.s32.totalorder %s29, 0
      %p227 = por %p225, %p226
      %p228 = scmp.ne.s32.totalorder %s217, %s220
      %p229 = scmp.eq.s32.totalorder %s34, 1
      %p230 = por %p228, %p229
      %p231 = scmp.ne.s32.totalorder %s220, %s221
      %p232 = scmp.eq.s32.totalorder %s34, 0
      %p233 = por %p231, %p232
      %p234 = scmp.ne.s32.totalorder %s220, %s221
      %p235 = scmp.eq.s32.totalorder %s35, 1
      %p236 = por %p234, %p235
      %p238 = scmp.ne.s32.totalorder %s221, %s237
      %p239 = scmp.eq.s32.totalorder %s35, 0
      %p240 = por %p238, %p239
      %s241 = ssub.s32 %s29, %s36
      %p242 = scmp.eq.s32.totalorder %s241, 0
      %s244 = sadd.s32 %s243, 1
      %s245 = scalar_select %p242, %s243, %s244
      %p248 = pneg %p242
      %p249 = scmp.eq.s32.totalorder %s29, 1
      %p250 = por %p248, %p249
      %p251 = scmp.ne.s32.totalorder %s243, %s246
      %p252 = scmp.eq.s32.totalorder %s29, 0
      %p253 = por %p251, %p252
      %p254 = scmp.ne.s32.totalorder %s243, %s246
      %p255 = scmp.eq.s32.totalorder %s34, 1
      %p256 = por %p254, %p255
      %p257 = scmp.ne.s32.totalorder %s246, %s247
      %p258 = scmp.eq.s32.totalorder %s34, 0
      %p259 = por %p257, %p258
      %p260 = scmp.ne.s32.totalorder %s246, %s247
      %p261 = scmp.eq.s32.totalorder %s35, 1
      %p262 = por %p260, %p261
      %p264 = scmp.ne.s32.totalorder %s247, %s263
      %p265 = scmp.eq.s32.totalorder %s35, 0
      %p266 = por %p264, %p265
      %s267 = ssub.s32 %s29, %s36
      %p268 = scmp.eq.s32.totalorder %s267, 0
      %s270 = sadd.s32 %s269, 1
      %s271 = scalar_select %p268, %s269, %s270
      %p274 = pneg %p268
      %p275 = scmp.eq.s32.totalorder %s29, 1
      %p276 = por %p274, %p275
      %p277 = scmp.ne.s32.totalorder %s269, %s272
      %p278 = scmp.eq.s32.totalorder %s29, 0
      %p279 = por %p277, %p278
      %p280 = scmp.ne.s32.totalorder %s269, %s272
      %p281 = scmp.eq.s32.totalorder %s34, 1
      %p282 = por %p280, %p281
      %p283 = scmp.ne.s32.totalorder %s272, %s273
      %p284 = scmp.eq.s32.totalorder %s34, 0
      %p285 = por %p283, %p284
      %p286 = scmp.ne.s32.totalorder %s272, %s273
      %p287 = scmp.eq.s32.totalorder %s35, 1
      %p288 = por %p286, %p287
      %p290 = scmp.ne.s32.totalorder %s273, %s289
      %p291 = scmp.eq.s32.totalorder %s35, 0
      %p292 = por %p290, %p291
      %s293 = ssub.s32 %s29, %s36
      %p294 = scmp.eq.s32.totalorder %s293, 0
      %s296 = sadd.s32 %s295, 1
      %s297 = scalar_select %p294, %s295, %s296
      %p300 = pneg %p294
      %p301 = scmp.eq.s32.totalorder %s29, 1
      %p302 = por %p300, %p301
      %p303 = scmp.ne.s32.totalorder %s295, %s298
      %p304 = scmp.eq.s32.totalorder %s29, 0
      %p305 = por %p303, %p304
      %p306 = scmp.ne.s32.totalorder %s295, %s298
      %p307 = scmp.eq.s32.totalorder %s34, 1
      %p308 = por %p306, %p307
      %p309 = scmp.ne.s32.totalorder %s298, %s299
      %p310 = scmp.eq.s32.totalorder %s34, 0
      %p311 = por %p309, %p310
      %p312 = scmp.ne.s32.totalorder %s298, %s299
      %p313 = scmp.eq.s32.totalorder %s35, 1
      %p314 = por %p312, %p313
      %p316 = scmp.ne.s32.totalorder %s299, %s315
      %p317 = scmp.eq.s32.totalorder %s35, 0
      %p318 = por %p316, %p317
      %s319 = ssub.s32 %s29, %s36
      %p320 = scmp.eq.s32.totalorder %s319, 0
      %s322 = sadd.s32 %s321, 1
      %s323 = scalar_select %p320, %s321, %s322
      %p326 = pneg %p320
      %p327 = scmp.eq.s32.totalorder %s29, 1
      %p328 = por %p326, %p327
      %p329 = scmp.ne.s32.totalorder %s321, %s324
      %p330 = scmp.eq.s32.totalorder %s29, 0
      %p331 = por %p329, %p330
      %p332 = scmp.ne.s32.totalorder %s321, %s324
      %p333 = scmp.eq.s32.totalorder %s34, 1
      %p334 = por %p332, %p333
      %p335 = scmp.ne.s32.totalorder %s324, %s325
      %p336 = scmp.eq.s32.totalorder %s34, 0
      %p337 = por %p335, %p336
      %p338 = scmp.ne.s32.totalorder %s324, %s325
      %p339 = scmp.eq.s32.totalorder %s35, 1
      %p340 = por %p338, %p339
      %p342 = scmp.ne.s32.totalorder %s325, %s341
      %p343 = scmp.eq.s32.totalorder %s35, 0
      %p344 = por %p342, %p343
      %s346 = sadd.s32 %s345, 1
      %p349 = scmp.eq.s32.totalorder %s29, 1
      %p350 = scmp.ne.s32.totalorder %s345, %s347
      %p351 = scmp.eq.s32.totalorder %s29, 0
      %p352 = por %p350, %p351
      %p353 = scmp.ne.s32.totalorder %s345, %s347
      %p354 = scmp.eq.s32.totalorder %s34, 1
      %p355 = por %p353, %p354
      %p356 = scmp.ne.s32.totalorder %s347, %s348
      %p357 = scmp.eq.s32.totalorder %s34, 0
      %p358 = por %p356, %p357
      %p359 = scmp.ne.s32.totalorder %s347, %s348
      %p360 = scmp.eq.s32.totalorder %s35, 1
      %p361 = por %p359, %p360
      %p363 = scmp.ne.s32.totalorder %s348, %s362
      %p364 = scmp.eq.s32.totalorder %s35, 0
      %p365 = por %p363, %p364
      %p366 = scmp.le.s32.totalorder 1, %s29
      %p367 = scmp.lt.s32.totalorder %s29, 3
      %p368 = pnand %p366, %p367
      %p369 = pneg %p368
      // Predicated region
      $region9: #{dsvit_forward.1} parent=5 // pred_check
        _
      $region10: #{dsvit_forward.1} parent=5 // pred_check_branch
        %371 = sbr.rel (%p368) target = $region12
      $region11: #{dsvit_forward.1} parent=5 // pred_region
        %s372 = ssub.s32 %s29, 1
        // Predicated region
        $region13: #{dsvit_forward.1} parent=11 // pred_check
          %p373 = pneg %p50
        $region14: #{dsvit_forward.1} parent=11 // pred_check_branch
          %375 = sbr.rel (%p373) target = $region16
        $region15: #{dsvit_forward.1} parent=11 // pred_region
          _
        $region16: #{dsvit_forward.1} parent=11 // pred_fallthru
          _
        // Predicated region
        $region17: #{dsvit_forward.1} parent=11 // pred_check
          %p376 = pneg %p71
        $region18: #{dsvit_forward.1} parent=11 // pred_check_branch
          %378 = sbr.rel (%p376) target = $region20
        $region19: #{dsvit_forward.1} parent=11 // pred_region
          _
        $region20: #{dsvit_forward.1} parent=11 // pred_fallthru
          _
        // Predicated region
        $region21: #{dsvit_forward.1} parent=11 // pred_check
          %p379 = pneg %p92
        $region22: #{dsvit_forward.1} parent=11 // pred_check_branch
          %381 = sbr.rel (%p379) target = $region24
        $region23: #{dsvit_forward.1} parent=11 // pred_region
          _
        $region24: #{dsvit_forward.1} parent=11 // pred_fallthru
          _
        // Predicated region
        $region25: #{dsvit_forward.1} parent=11 // pred_check
          %p382 = pneg %p113
        $region26: #{dsvit_forward.1} parent=11 // pred_check_branch
          %384 = sbr.rel (%p382) target = $region28
        $region27: #{dsvit_forward.1} parent=11 // pred_region
          _
        $region28: #{dsvit_forward.1} parent=11 // pred_fallthru
          _
        // Predicated region
        $region29: #{dsvit_forward.1} parent=11 // pred_check
          %p385 = pneg %p134
        $region30: #{dsvit_forward.1} parent=11 // pred_check_branch
          %387 = sbr.rel (%p385) target = $region32
        $region31: #{dsvit_forward.1} parent=11 // pred_region
          _
        $region32: #{dsvit_forward.1} parent=11 // pred_fallthru
          _
        // Predicated region
        $region33: #{dsvit_forward.1} parent=11 // pred_check
          %p388 = pneg %p155
        $region34: #{dsvit_forward.1} parent=11 // pred_check_branch
          %390 = sbr.rel (%p388) target = $region36
        $region35: #{dsvit_forward.1} parent=11 // pred_region
          _
        $region36: #{dsvit_forward.1} parent=11 // pred_fallthru
          _
      $region12: #{dsvit_forward.1} parent=5 // pred_fallthru
        _
      %p391 = scmp.lt.s32.totalorder %s29, 2
      // Predicated region
      $region37: #{dsvit_forward.1} parent=5 // pred_check
        %p392 = pneg %p391
      $region38: #{dsvit_forward.1} parent=5 // pred_check_branch
        %394 = sbr.rel (%p392) target = $region40
      $region39: #{dsvit_forward.1} parent=5 // pred_region
        // Predicated region
        $region41: #{dsvit_forward.1} parent=39 // pred_check
          %p395 = pneg %p175
        $region42: #{dsvit_forward.1} parent=39 // pred_check_branch
          %397 = sbr.rel (%p395) target = $region44
        $region43: #{dsvit_forward.1} parent=39 // pred_region
          %s398 = sand.u32 %s165, 1
          %s399 = scalar_lea.sflag [#allocation4], %s398
          %s400 = sand.u32 %s165, 1
          %s401 = smul.addr %s400, 192
          %s402 = scalar_lea.vmem [#allocation3], %s401
          %404 = vsyncadd %s399, 0
          %s405 = smul.addr %s29, 48
          %s406 = smul.addr %s405, 4
          %s407 = scalar_lea.hbm %s6, %s406
          %s408 = sshll.u32 %s407, 4
          %s409 = int_to_ptr.hbm [resolvable:$true] %s408
          %s410 = sshll.u32 %s402, 4
          %s411 = int_to_ptr.vmem [resolvable:$true] %s410
          %416 = dma.hbm_to_vmem [thread:$0]  %s409, 3072, %s411, %s399, 192, 192, 12
        $region44: #{dsvit_forward.1} parent=39 // pred_fallthru
          _
        // Predicated region
        $region45: #{dsvit_forward.1} parent=39 // pred_check
          %p417 = pneg %p201
        $region46: #{dsvit_forward.1} parent=39 // pred_check_branch
          %419 = sbr.rel (%p417) target = $region48
        $region47: #{dsvit_forward.1} parent=39 // pred_region
          %p420 = scmp.lt.s32.totalorder %s29, 1
          %s421 = scalar_select %p420, %s29, 1
          %s422 = smul.addr %s421, 3
          %s423 = scalar_lea.vmem %s7, %s422
        $region48: #{dsvit_forward.1} parent=39 // pred_fallthru
          _
        // Predicated region
        $region49: #{dsvit_forward.1} parent=39 // pred_check
          %p424 = pneg %p227
        $region50: #{dsvit_forward.1} parent=39 // pred_check_branch
          %426 = sbr.rel (%p424) target = $region52
        $region51: #{dsvit_forward.1} parent=39 // pred_region
          %s427 = sand.u32 %s29, 1
          %s428 = scalar_lea.sflag [#allocation7], %s427
          %s429 = sand.u32 %s217, 1
          %s430 = smul.addr %s429, 64
          %s431 = scalar_lea.vmem [#allocation6], %s430
          %433 = vsyncadd %s428, 0
          %s434 = smul.addr %s29, 16
          %s435 = smul.addr %s434, 4
          %s436 = scalar_lea.hbm %s8, %s435
          %s437 = sshll.u32 %s436, 4
          %s438 = int_to_ptr.hbm [resolvable:$true] %s437
          %s439 = sshll.u32 %s431, 4
          %s440 = int_to_ptr.vmem [resolvable:$true] %s439
          %445 = dma.hbm_to_vmem [thread:$0]  %s438, 1024, %s440, %s428, 64, 64, 4
        $region52: #{dsvit_forward.1} parent=39 // pred_fallthru
          _
        // Predicated region
        $region53: #{dsvit_forward.1} parent=39 // pred_check
          %p446 = pneg %p253
        $region54: #{dsvit_forward.1} parent=39 // pred_check_branch
          %448 = sbr.rel (%p446) target = $region56
        $region55: #{dsvit_forward.1} parent=39 // pred_region
          %s449 = sand.u32 %s29, 1
          %s450 = scalar_lea.sflag [#allocation7], %s449
          %s451 = sand.u32 %s243, 1
          %s452 = smul.addr %s451, 256
          %s453 = scalar_lea.vmem [#allocation8], %s452
          %455 = vsyncadd %s450, 0
          %s456 = smul.addr %s29, 64
          %s457 = smul.addr %s456, 4
          %s458 = scalar_lea.hbm %s9, %s457
          %s459 = sshll.u32 %s458, 4
          %s460 = int_to_ptr.hbm [resolvable:$true] %s459
          %s461 = sshll.u32 %s453, 4
          %s462 = int_to_ptr.vmem [resolvable:$true] %s461
          %467 = dma.hbm_to_vmem [thread:$0]  %s460, 4096, %s462, %s450, 256, 256, 16
        $region56: #{dsvit_forward.1} parent=39 // pred_fallthru
          _
        // Predicated region
        $region57: #{dsvit_forward.1} parent=39 // pred_check
          %p468 = pneg %p279
        $region58: #{dsvit_forward.1} parent=39 // pred_check_branch
          %470 = sbr.rel (%p468) target = $region60
        $region59: #{dsvit_forward.1} parent=39 // pred_region
          %p471 = scmp.lt.s32.totalorder %s29, 1
          %s472 = scalar_select %p471, %s29, 1
          %s473 = smul.addr %s472, 4
          %s474 = scalar_lea.vmem %s10, %s473
        $region60: #{dsvit_forward.1} parent=39 // pred_fallthru
          _
        // Predicated region
        $region61: #{dsvit_forward.1} parent=39 // pred_check
          %p475 = pneg %p305
        $region62: #{dsvit_forward.1} parent=39 // pred_check_branch
          %477 = sbr.rel (%p475) target = $region64
        $region63: #{dsvit_forward.1} parent=39 // pred_region
          %s478 = sand.u32 %s295, 1
          %s479 = scalar_lea.sflag [#allocation10], %s478
          %s480 = sand.u32 %s295, 1
          %s481 = smul.addr %s480, 256
          %s482 = scalar_lea.vmem [#allocation9], %s481
          %484 = vsyncadd %s479, 0
          %s485 = smul.addr %s29, 64
          %s486 = smul.addr %s485, 4
          %s487 = scalar_lea.hbm %s11, %s486
          %s488 = sshll.u32 %s487, 4
          %s489 = int_to_ptr.hbm [resolvable:$true] %s488
          %s490 = sshll.u32 %s482, 4
          %s491 = int_to_ptr.vmem [resolvable:$true] %s490
          %496 = dma.hbm_to_vmem [thread:$0]  %s489, 4096, %s491, %s479, 64, 64, 4
        $region64: #{dsvit_forward.1} parent=39 // pred_fallthru
          _
        // Predicated region
        $region65: #{dsvit_forward.1} parent=39 // pred_check
          %p497 = pneg %p331
        $region66: #{dsvit_forward.1} parent=39 // pred_check_branch
          %499 = sbr.rel (%p497) target = $region68
        $region67: #{dsvit_forward.1} parent=39 // pred_region
          %p500 = scmp.lt.s32.totalorder %s29, 1
          %s501 = scalar_select %p500, %s29, 1
          %s502 = smul.addr %s501, 8
          %s503 = scalar_lea.vmem %s12, %s502
        $region68: #{dsvit_forward.1} parent=39 // pred_fallthru
          _
      $region40: #{dsvit_forward.1} parent=5 // pred_fallthru
        _
      %p504 = scmp.le.s32.totalorder 1, %s29
      %p505 = scmp.lt.s32.totalorder %s29, 3
      %p506 = pnand %p504, %p505
      %p507 = pneg %p506
      // Predicated region
      $region69: #{dsvit_forward.1} parent=5 // pred_check
        _
      $region70: #{dsvit_forward.1} parent=5 // pred_check_branch
        %509 = sbr.rel (%p506) target = $region72
      $region71: #{dsvit_forward.1} parent=5 // pred_region
        %s510 = ssub.s32 %s29, 1
        %s511 = sand.u32 %s168, 1
        %s512 = scalar_lea.sflag [#allocation4], %s511
        %s513 = sand.u32 %s168, 1
        %s514 = smul.addr %s513, 192
        %s515 = scalar_lea.vmem [#allocation3], %s514
        // Predicated region
        $region73: #{dsvit_forward.1} parent=71 // pred_check
          %p516 = pneg %p181
        $region74: #{dsvit_forward.1} parent=71 // pred_check_branch
          %518 = sbr.rel (%p516) target = $region76
        $region75: #{dsvit_forward.1} parent=71 // pred_region
          %520 = dma.done %s512, 3072
        $region76: #{dsvit_forward.1} parent=71 // pred_fallthru
          _
        %s521 = sand.u32 %s34, 1
        %s522 = scalar_lea.sflag [#allocation7], %s521
        %s523 = sand.u32 %s220, 1
        %s524 = smul.addr %s523, 64
        %s525 = scalar_lea.vmem [#allocation6], %s524
        // Predicated region
        $region77: #{dsvit_forward.1} parent=71 // pred_check
          %p526 = pneg %p233
        $region78: #{dsvit_forward.1} parent=71 // pred_check_branch
          %528 = sbr.rel (%p526) target = $region80
        $region79: #{dsvit_forward.1} parent=71 // pred_region
          %530 = dma.done %s522, 1024
        $region80: #{dsvit_forward.1} parent=71 // pred_fallthru
          _
        %s531 = sand.u32 %s34, 1
        %s532 = scalar_lea.sflag [#allocation7], %s531
        %s533 = sand.u32 %s246, 1
        %s534 = smul.addr %s533, 256
        %s535 = scalar_lea.vmem [#allocation8], %s534
        // Predicated region
        $region81: #{dsvit_forward.1} parent=71 // pred_check
          %p536 = pneg %p259
        $region82: #{dsvit_forward.1} parent=71 // pred_check_branch
          %538 = sbr.rel (%p536) target = $region84
        $region83: #{dsvit_forward.1} parent=71 // pred_region
          %540 = dma.done %s532, 4096
        $region84: #{dsvit_forward.1} parent=71 // pred_fallthru
          _
        %s541 = sand.u32 %s298, 1
        %s542 = scalar_lea.sflag [#allocation10], %s541
        %s543 = sand.u32 %s298, 1
        %s544 = smul.addr %s543, 256
        %s545 = scalar_lea.vmem [#allocation9], %s544
        // Predicated region
        $region85: #{dsvit_forward.1} parent=71 // pred_check
          %p546 = pneg %p311
        $region86: #{dsvit_forward.1} parent=71 // pred_check_branch
          %548 = sbr.rel (%p546) target = $region88
        $region87: #{dsvit_forward.1} parent=71 // pred_region
          %550 = dma.done %s542, 4096
        $region88: #{dsvit_forward.1} parent=71 // pred_fallthru
          _
        %p551 = pneg %p50
        %p552 = pneg %p47
        %p553 = pneg %p71
        %p554 = pneg %p68
        %p555 = pneg %p92
        %p556 = pneg %p89
        %p557 = pneg %p113
        %p558 = pneg %p110
        %p559 = pneg %p134
        %p560 = pneg %p131
        %p561 = pneg %p155
        %p562 = pneg %p152
        %s563 = sand.u32 %s168, 1
        %s564 = scalar_lea.sflag [#allocation4], %s563
        %s565 = sand.u32 %s168, 1
        %s566 = smul.addr %s565, 192
        %s567 = scalar_lea.vmem [#allocation3], %s566
        %p568 = pneg %p181
        %p569 = pneg %p178
        %p570 = scmp.lt.s32.totalorder %s34, 1
        %s571 = scalar_select %p570, %s34, 1
        %s572 = smul.addr %s571, 3
        %s573 = scalar_lea.vmem %s7, %s572
        %p574 = pneg %p207
        %p575 = pneg %p204
        %s576 = sand.u32 %s34, 1
        %s577 = scalar_lea.sflag [#allocation7], %s576
        %s578 = sand.u32 %s220, 1
        %s579 = smul.addr %s578, 64
        %s580 = scalar_lea.vmem [#allocation6], %s579
        %p581 = pneg %p233
        %p582 = pneg %p230
        %s583 = sand.u32 %s34, 1
        %s584 = scalar_lea.sflag [#allocation7], %s583
        %s585 = sand.u32 %s246, 1
        %s586 = smul.addr %s585, 256
        %s587 = scalar_lea.vmem [#allocation8], %s586
        %p588 = pneg %p259
        %p589 = pneg %p256
        %p590 = scmp.lt.s32.totalorder %s34, 1
        %s591 = scalar_select %p590, %s34, 1
        %s592 = smul.addr %s591, 4
        %s593 = scalar_lea.vmem %s10, %s592
        %p594 = pneg %p285
        %p595 = pneg %p282
        %s596 = sand.u32 %s298, 1
        %s597 = scalar_lea.sflag [#allocation10], %s596
        %s598 = sand.u32 %s298, 1
        %s599 = smul.addr %s598, 256
        %s600 = scalar_lea.vmem [#allocation9], %s599
        %p601 = pneg %p311
        %p602 = pneg %p308
        %p603 = scmp.lt.s32.totalorder %s34, 1
        %s604 = scalar_select %p603, %s34, 1
        %s605 = smul.addr %s604, 8
        %s606 = scalar_lea.vmem %s12, %s605
        %p607 = pneg %p337
        %p608 = pneg %p334
        %p609 = pneg %p358
        %p610 = pneg %p355
        %p611 = scmp.lt.s32.totalorder %s34, 1
        %s612 = scalar_select %p611, %s34, 1
        %s613 = smul.addr %s612, 3
        %s614 = scalar_lea.vmem %s7, %s613
        %p615 = scmp.lt.s32.totalorder %s34, 1
        %s616 = scalar_select %p615, %s34, 1
        %s617 = smul.addr %s616, 4
        %s618 = scalar_lea.vmem %s10, %s617
        %p619 = scmp.lt.s32.totalorder %s34, 1
        %s620 = scalar_select %p619, %s34, 1
        %s621 = smul.addr %s620, 8
        %s622 = scalar_lea.vmem %s12, %s621
        %p624 = scmp.eq.s32.totalorder %s34, 0
        // Predicated region
        $region89: #{dsvit_forward.1} parent=71 // pred_check
          %p625 = pneg %p624
        $region90: #{dsvit_forward.1} parent=71 // pred_check_branch
          %627 = sbr.rel (%p625) target = $region92
        $region91: #{dsvit_forward.1} parent=71 // pred_region
          %v628 = vld [vmem:[%s5] sm:$0xff]
          %v629 = vld [vmem:[%s0] sm:$0x3]
          %v630 = vld [vmem:[%s0 + $0x2] sm:$0x3]
          %v631 = vpack.c.bf16 %v629, %v629
          %v632 = vpack.c.bf16 %v630, %v630
          %v633 = vld [vmem:[%s2] sm:$0xf]
          %v634 = vld [vmem:[%s2 + $0x4] sm:$0xf]
          %v635 = vld [vmem:[%s2 + $0x8] sm:$0xf]
          %v636 = vld [vmem:[%s2 + $0xc] sm:$0xf]
          %v637 = vld [vmem:[%s1] sm:$0x3]
          %v638 = vld [vmem:[%s1 + $0x2] sm:$0x3]
          %v639 = vpack.c.bf16 %v637, %v637
          %v640 = vpack.c.bf16 %v638, %v638
          %v641 = vld [vmem:[%s3] sm:$0xf]
          %v642 = vld [vmem:[%s3 + $0x4] sm:$0xf]
          %v643 = vld [vmem:[%s3 + $0x8] sm:$0xf]
          %v644 = vld [vmem:[%s3 + $0xc] sm:$0xf]
          %v646 = vrot.slane %v628, 2
          %vm647 = vcmask 1040384
          %vm648 = vcmask 1042434
          %vm649 = vmor %vm647, %vm648
          %vm650 = vcmask 1044484
          %vm651 = vmor %vm649, %vm650
          %vm652 = vcmask 1046534
          %vm653 = vmor %vm651, %vm652
          %v654 = vrot.slane %v628, 7
          %v655 = vrot.slane %v654, 2
          %v656 = vrot.slane %v646, 7
          %v657 = vsel %vm653, %v655, %v656
          %659 = vst [vmem:[#allocation1] ss:$9 sm:$0xff] %v631
          %s661 = scalar_lea.vmem [#allocation1], 1
          %662 = vst [vmem:[%s661] ss:$9 sm:$0xff] %v632
          %v663 = vld [vmem:[#allocation1] sm:$0xff]
          %v668 = vunpack.c.l.b16 %v633
          %v669 = vunpack.c.l.b16 %v634
          %v670 = vunpack.c.l.b16 %v635
          %v671 = vunpack.c.l.b16 %v636
          %v672 = vpack.c.b16 %v669, %v668
          %v673 = vpack.c.b16 %v671, %v670
          %676 = vst [vmem:[#allocation1] ss:$4 sm:$0xff] %v657
          %s677 = scalar_lea.vmem [#allocation1], 1
          %678 = vst [vmem:[%s677] ss:$4 sm:$0xff] %v657
          %v679 = vld.sshfl [vmem:[#allocation1] sm:$0xff pattern:$0x73625140]
          %vm681 = vcmask 261120
          %v682 = vsel %vm681, %v663, 0
          %684 = vmatpush.bf16.msra.mxu0 0
          %685 = vmatpush.bf16.msra.mxu0 0
          %686 = vmatpush.bf16.msra.mxu0 0
          %687 = vmatpush.bf16.msra.mxu0 0
          %688 = vmatpush.bf16.msra.mxu0 0
          %689 = vmatpush.bf16.msra.mxu0 0
          %690 = vmatpush.bf16.msra.mxu0 %v673
          %691 = vmatpush.bf16.msra.mxu0 %v672
          %692 = vmatmul.bf16.gmra.mxu0 %v682
          %v693 = vpop.f32.mrf.mxu0
          %v694 = vadd.f32 %v679, %v693
          %v695 = vpop.f32.mrf.mxu0
          %696 = vdwg.mxu0
          %v698 = vrot.slane %v694, 2
          %701 = vst [vmem:[#allocation1] ss:$9 sm:$0xff] %v639
          %s703 = scalar_lea.vmem [#allocation1], 1
          %704 = vst [vmem:[%s703] ss:$9 sm:$0xff] %v640
          %v705 = vld [vmem:[#allocation1] sm:$0xff]
          %v710 = vunpack.c.l.b16 %v641
          %v711 = vunpack.c.l.b16 %v642
          %v712 = vunpack.c.l.b16 %v643
          %v713 = vunpack.c.l.b16 %v644
          %v714 = vpack.c.b16 %v711, %v710
          %v715 = vpack.c.b16 %v713, %v712
          %718 = vst [vmem:[#allocation1] ss:$4 sm:$0xff] %v657
          %s719 = scalar_lea.vmem [#allocation1], 1
          %720 = vst [vmem:[%s719] ss:$4 sm:$0xff] %v657
          %v721 = vld.sshfl [vmem:[#allocation1] sm:$0xff pattern:$0x73625140]
          %v723 = vsel %vm681, %v705, 0
          %725 = vmatpush.bf16.msra.mxu0 0
          %726 = vmatpush.bf16.msra.mxu0 0
          %727 = vmatpush.bf16.msra.mxu0 0
          %728 = vmatpush.bf16.msra.mxu0 0
          %729 = vmatpush.bf16.msra.mxu0 0
          %730 = vmatpush.bf16.msra.mxu0 0
          %731 = vmatpush.bf16.msra.mxu0 %v715
          %732 = vmatpush.bf16.msra.mxu0 %v714
          %733 = vmatmul.bf16.gmra.mxu0 %v723
          %v734 = vpop.f32.mrf.mxu0
          %v735 = vadd.f32 %v721, %v734
          %v736 = vpop.f32.mrf.mxu0
          %737 = vdwg.mxu0
          %v739 = vrot.slane %v735, 2
          %v741 = vld [vmem:[%s4] sm:$0x1]
          %v742 = vadd.f32 %v741, %v628
          %v744 = vperm.slane %v742, 0
          %746 = vst [vmem:[#allocation2] sm:$0x3] %v744
          %747 = vst [vmem:[#allocation2 + $0x2] sm:$0x3] %v694
          %748 = vst [vmem:[#allocation2 + $0x4] sm:$0x3] %v735
          %749 = vst [vmem:[#allocation2 + $0x6] sm:$0x3] 0.0
          %750 = vst [vmem:[#allocation2 + $0x8] sm:$0x3] %v744
          %751 = vst [vmem:[#allocation2 + $0xa] sm:$0x3] %v698
          %752 = vst [vmem:[#allocation2 + $0xc] sm:$0x3] %v739
          %753 = vst [vmem:[#allocation2 + $0xe] sm:$0x3] 0.0
        $region92: #{dsvit_forward.1} parent=71 // pred_fallthru
          _
        %v754 = vld [vmem:[%s515] sm:$0xff]
        %v755 = vld [vmem:[%s515 + $0x8] sm:$0xf]
        %v756 = vld [vmem:[%s515 + $0xc] sm:$0xff]
        %v757 = vld [vmem:[%s515 + $0x14] sm:$0xf]
        %v758 = vld [vmem:[%s515 + $0x18] sm:$0xff]
        %v759 = vld [vmem:[%s515 + $0x20] sm:$0xf]
        %v760 = vld [vmem:[%s515 + $0x24] sm:$0xff]
        %v761 = vld [vmem:[%s515 + $0x2c] sm:$0xf]
        %v762 = vld [vmem:[%s515 + $0x30] sm:$0xff]
        %v763 = vld [vmem:[%s515 + $0x38] sm:$0xf]
        %v764 = vld [vmem:[%s515 + $0x3c] sm:$0xff]
        %v765 = vld [vmem:[%s515 + $0x44] sm:$0xf]
        %v766 = vld [vmem:[%s515 + $0x48] sm:$0xff]
        %v767 = vld [vmem:[%s515 + $0x50] sm:$0xf]
        %v768 = vld [vmem:[%s515 + $0x54] sm:$0xff]
        %v769 = vld [vmem:[%s515 + $0x5c] sm:$0xf]
        %v770 = vld [vmem:[%s515 + $0x60] sm:$0xff]
        %v771 = vld [vmem:[%s515 + $0x68] sm:$0xf]
        %v772 = vld [vmem:[%s515 + $0x6c] sm:$0xff]
        %v773 = vld [vmem:[%s515 + $0x74] sm:$0xf]
        %v774 = vld [vmem:[%s515 + $0x78] sm:$0xff]
        %v775 = vld [vmem:[%s515 + $0x80] sm:$0xf]
        %v776 = vld [vmem:[%s515 + $0x84] sm:$0xff]
        %v777 = vld [vmem:[%s515 + $0x8c] sm:$0xf]
        %v778 = vld [vmem:[%s515 + $0x90] sm:$0xff]
        %v779 = vld [vmem:[%s515 + $0x98] sm:$0xf]
        %v780 = vld [vmem:[%s515 + $0x9c] sm:$0xff]
        %v781 = vld [vmem:[%s515 + $0xa4] sm:$0xf]
        %v782 = vld [vmem:[%s515 + $0xa8] sm:$0xff]
        %v783 = vld [vmem:[%s515 + $0xb0] sm:$0xf]
        %v784 = vld [vmem:[%s515 + $0xb4] sm:$0xff]
        %v785 = vld [vmem:[%s515 + $0xbc] sm:$0xf]
        %v786 = vld [vmem:[%s614] sm:$0x7]
        %v787 = vld [vmem:[%s525] sm:$0xf]
        %v788 = vld [vmem:[%s525 + $0x4] sm:$0xf]
        %v789 = vld [vmem:[%s525 + $0x8] sm:$0xf]
        %v790 = vld [vmem:[%s525 + $0xc] sm:$0xf]
        %v791 = vld [vmem:[%s525 + $0x10] sm:$0xf]
        %v792 = vld [vmem:[%s525 + $0x14] sm:$0xf]
        %v793 = vld [vmem:[%s525 + $0x18] sm:$0xf]
        %v794 = vld [vmem:[%s525 + $0x1c] sm:$0xf]
        %v795 = vld [vmem:[%s525 + $0x20] sm:$0xf]
        %v796 = vld [vmem:[%s525 + $0x24] sm:$0xf]
        %v797 = vld [vmem:[%s525 + $0x28] sm:$0xf]
        %v798 = vld [vmem:[%s525 + $0x2c] sm:$0xf]
        %v799 = vld [vmem:[%s525 + $0x30] sm:$0xf]
        %v800 = vld [vmem:[%s525 + $0x34] sm:$0xf]
        %v801 = vld [vmem:[%s525 + $0x38] sm:$0xf]
        %v802 = vld [vmem:[%s525 + $0x3c] sm:$0xf]
        %v803 = vld [vmem:[%s535] sm:$0xff]
        %v804 = vld [vmem:[%s535 + $0x8] sm:$0xff]
        %v805 = vld [vmem:[%s535 + $0x10] sm:$0xff]
        %v806 = vld [vmem:[%s535 + $0x18] sm:$0xff]
        %v807 = vld [vmem:[%s535 + $0x20] sm:$0xff]
        %v808 = vld [vmem:[%s535 + $0x28] sm:$0xff]
        %v809 = vld [vmem:[%s535 + $0x30] sm:$0xff]
        %v810 = vld [vmem:[%s535 + $0x38] sm:$0xff]
        %v811 = vld [vmem:[%s535 + $0x40] sm:$0xff]
        %v812 = vld [vmem:[%s535 + $0x48] sm:$0xff]
        %v813 = vld [vmem:[%s535 + $0x50] sm:$0xff]
        %v814 = vld [vmem:[%s535 + $0x58] sm:$0xff]
        %v815 = vld [vmem:[%s535 + $0x60] sm:$0xff]
        %v816 = vld [vmem:[%s535 + $0x68] sm:$0xff]
        %v817 = vld [vmem:[%s535 + $0x70] sm:$0xff]
        %v818 = vld [vmem:[%s535 + $0x78] sm:$0xff]
        %v819 = vld [vmem:[%s535 + $0x80] sm:$0xff]
        %v820 = vld [vmem:[%s535 + $0x88] sm:$0xff]
        %v821 = vld [vmem:[%s535 + $0x90] sm:$0xff]
        %v822 = vld [vmem:[%s535 + $0x98] sm:$0xff]
        %v823 = vld [vmem:[%s535 + $0xa0] sm:$0xff]
        %v824 = vld [vmem:[%s535 + $0xa8] sm:$0xff]
        %v825 = vld [vmem:[%s535 + $0xb0] sm:$0xff]
        %v826 = vld [vmem:[%s535 + $0xb8] sm:$0xff]
        %v827 = vld [vmem:[%s535 + $0xc0] sm:$0xff]
        %v828 = vld [vmem:[%s535 + $0xc8] sm:$0xff]
        %v829 = vld [vmem:[%s535 + $0xd0] sm:$0xff]
        %v830 = vld [vmem:[%s535 + $0xd8] sm:$0xff]
        %v831 = vld [vmem:[%s535 + $0xe0] sm:$0xff]
        %v832 = vld [vmem:[%s535 + $0xe8] sm:$0xff]
        %v833 = vld [vmem:[%s535 + $0xf0] sm:$0xff]
        %v834 = vld [vmem:[%s535 + $0xf8] sm:$0xff]
        %v835 = vld [vmem:[%s618] sm:$0xf]
        %v836 = vld [vmem:[%s545] sm:$0xf]
        %v837 = vld [vmem:[%s545 + $0x4] sm:$0xf]
        %v838 = vld [vmem:[%s545 + $0x8] sm:$0xf]
        %v839 = vld [vmem:[%s545 + $0xc] sm:$0xf]
        %v840 = vld [vmem:[%s545 + $0x10] sm:$0xf]
        %v841 = vld [vmem:[%s545 + $0x14] sm:$0xf]
        %v842 = vld [vmem:[%s545 + $0x18] sm:$0xf]
        %v843 = vld [vmem:[%s545 + $0x1c] sm:$0xf]
        %v844 = vld [vmem:[%s545 + $0x20] sm:$0xf]
        %v845 = vld [vmem:[%s545 + $0x24] sm:$0xf]
        %v846 = vld [vmem:[%s545 + $0x28] sm:$0xf]
        %v847 = vld [vmem:[%s545 + $0x2c] sm:$0xf]
        %v848 = vld [vmem:[%s545 + $0x30] sm:$0xf]
        %v849 = vld [vmem:[%s545 + $0x34] sm:$0xf]
        %v850 = vld [vmem:[%s545 + $0x38] sm:$0xf]
        %v851 = vld [vmem:[%s545 + $0x3c] sm:$0xf]
        %v852 = vld [vmem:[%s545 + $0x40] sm:$0xf]
        %v853 = vld [vmem:[%s545 + $0x44] sm:$0xf]
        %v854 = vld [vmem:[%s545 + $0x48] sm:$0xf]
        %v855 = vld [vmem:[%s545 + $0x4c] sm:$0xf]
        %v856 = vld [vmem:[%s545 + $0x50] sm:$0xf]
        %v857 = vld [vmem:[%s545 + $0x54] sm:$0xf]
        %v858 = vld [vmem:[%s545 + $0x58] sm:$0xf]
        %v859 = vld [vmem:[%s545 + $0x5c] sm:$0xf]
        %v860 = vld [vmem:[%s545 + $0x60] sm:$0xf]
        %v861 = vld [vmem:[%s545 + $0x64] sm:$0xf]
        %v862 = vld [vmem:[%s545 + $0x68] sm:$0xf]
        %v863 = vld [vmem:[%s545 + $0x6c] sm:$0xf]
        %v864 = vld [vmem:[%s545 + $0x70] sm:$0xf]
        %v865 = vld [vmem:[%s545 + $0x74] sm:$0xf]
        %v866 = vld [vmem:[%s545 + $0x78] sm:$0xf]
        %v867 = vld [vmem:[%s545 + $0x7c] sm:$0xf]
        %v868 = vld [vmem:[%s545 + $0x80] sm:$0xf]
        %v869 = vld [vmem:[%s545 + $0x84] sm:$0xf]
        %v870 = vld [vmem:[%s545 + $0x88] sm:$0xf]
        %v871 = vld [vmem:[%s545 + $0x8c] sm:$0xf]
        %v872 = vld [vmem:[%s545 + $0x90] sm:$0xf]
        %v873 = vld [vmem:[%s545 + $0x94] sm:$0xf]
        %v874 = vld [vmem:[%s545 + $0x98] sm:$0xf]
        %v875 = vld [vmem:[%s545 + $0x9c] sm:$0xf]
        %v876 = vld [vmem:[%s545 + $0xa0] sm:$0xf]
        %v877 = vld [vmem:[%s545 + $0xa4] sm:$0xf]
        %v878 = vld [vmem:[%s545 + $0xa8] sm:$0xf]
        %v879 = vld [vmem:[%s545 + $0xac] sm:$0xf]
        %v880 = vld [vmem:[%s545 + $0xb0] sm:$0xf]
        %v881 = vld [vmem:[%s545 + $0xb4] sm:$0xf]
        %v882 = vld [vmem:[%s545 + $0xb8] sm:$0xf]
        %v883 = vld [vmem:[%s545 + $0xbc] sm:$0xf]
        %v884 = vld [vmem:[%s545 + $0xc0] sm:$0xf]
        %v885 = vld [vmem:[%s545 + $0xc4] sm:$0xf]
        %v886 = vld [vmem:[%s545 + $0xc8] sm:$0xf]
        %v887 = vld [vmem:[%s545 + $0xcc] sm:$0xf]
        %v888 = vld [vmem:[%s545 + $0xd0] sm:$0xf]
        %v889 = vld [vmem:[%s545 + $0xd4] sm:$0xf]
        %v890 = vld [vmem:[%s545 + $0xd8] sm:$0xf]
        %v891 = vld [vmem:[%s545 + $0xdc] sm:$0xf]
        %v892 = vld [vmem:[%s545 + $0xe0] sm:$0xf]
        %v893 = vld [vmem:[%s545 + $0xe4] sm:$0xf]
        %v894 = vld [vmem:[%s545 + $0xe8] sm:$0xf]
        %v895 = vld [vmem:[%s545 + $0xec] sm:$0xf]
        %v896 = vld [vmem:[%s545 + $0xf0] sm:$0xf]
        %v897 = vld [vmem:[%s545 + $0xf4] sm:$0xf]
        %v898 = vld [vmem:[%s545 + $0xf8] sm:$0xf]
        %v899 = vld [vmem:[%s545 + $0xfc] sm:$0xf]
        %v900 = vld [vmem:[%s622] sm:$0xff]
        %v901 = vld [vmem:[#allocation2] sm:$0xff]
        %v902 = vld [vmem:[#allocation2 + $0x8] sm:$0xff]
        %v903 = vpack.c.bf16 %v902, %v901
        %v905 = vperm.slane %v786, 0
        %v906 = vperm.slane %v786, 1
        %v907 = vperm.slane %v786, 2
        %v943 = vunpack.c.l.b16 %v754
        %v944 = vunpack.c.h.b16 %v754
        %v945 = vunpack.c.l.b16 %v755
        %v946 = vunpack.c.l.b16 %v756
        %v947 = vunpack.c.h.b16 %v756
        %v948 = vunpack.c.l.b16 %v757
        %v949 = vunpack.c.l.b16 %v758
        %v950 = vunpack.c.h.b16 %v758
        %v951 = vunpack.c.l.b16 %v759
        %v952 = vunpack.c.l.b16 %v760
        %v953 = vunpack.c.h.b16 %v760
        %v954 = vunpack.c.l.b16 %v761
        %v955 = vunpack.c.l.b16 %v762
        %v956 = vunpack.c.h.b16 %v762
        %v957 = vunpack.c.l.b16 %v763
        %v958 = vunpack.c.l.b16 %v764
        %v959 = vunpack.c.h.b16 %v764
        %v960 = vunpack.c.l.b16 %v765
        %v961 = vunpack.c.l.b16 %v766
        %v962 = vunpack.c.h.b16 %v766
        %v963 = vunpack.c.l.b16 %v767
        %v964 = vunpack.c.l.b16 %v768
        %v965 = vunpack.c.h.b16 %v768
        %v966 = vunpack.c.l.b16 %v769
        %v967 = vunpack.c.l.b16 %v770
        %v968 = vunpack.c.h.b16 %v770
        %v969 = vunpack.c.l.b16 %v771
        %v970 = vunpack.c.l.b16 %v772
        %v971 = vunpack.c.h.b16 %v772
        %v972 = vunpack.c.l.b16 %v773
        %v973 = vunpack.c.l.b16 %v774
        %v974 = vunpack.c.h.b16 %v774
        %v975 = vunpack.c.l.b16 %v775
        %v976 = vunpack.c.l.b16 %v776
        %v977 = vunpack.c.h.b16 %v776
        %v978 = vunpack.c.l.b16 %v777
        %v979 = vunpack.c.l.b16 %v778
        %v980 = vunpack.c.h.b16 %v778
        %v981 = vunpack.c.l.b16 %v779
        %v982 = vunpack.c.l.b16 %v780
        %v983 = vunpack.c.h.b16 %v780
        %v984 = vunpack.c.l.b16 %v781
        %v985 = vunpack.c.l.b16 %v782
        %v986 = vunpack.c.h.b16 %v782
        %v987 = vunpack.c.l.b16 %v783
        %v988 = vunpack.c.l.b16 %v784
        %v989 = vunpack.c.h.b16 %v784
        %v990 = vunpack.c.l.b16 %v785
        %v991 = vpack.c.b16 %v946, %v943
        %v992 = vpack.c.b16 %v947, %v944
        %v993 = vpack.c.b16 %v948, %v945
        %v994 = vpack.c.b16 %v952, %v949
        %v995 = vpack.c.b16 %v953, %v950
        %v996 = vpack.c.b16 %v954, %v951
        %v997 = vpack.c.b16 %v958, %v955
        %v998 = vpack.c.b16 %v959, %v956
        %v999 = vpack.c.b16 %v960, %v957
        %v1000 = vpack.c.b16 %v964, %v961
        %v1001 = vpack.c.b16 %v965, %v962
        %v1002 = vpack.c.b16 %v966, %v963
        %v1003 = vpack.c.b16 %v970, %v967
        %v1004 = vpack.c.b16 %v971, %v968
        %v1005 = vpack.c.b16 %v972, %v969
        %v1006 = vpack.c.b16 %v976, %v973
        %v1007 = vpack.c.b16 %v977, %v974
        %v1008 = vpack.c.b16 %v978, %v975
        %v1009 = vpack.c.b16 %v982, %v979
        %v1010 = vpack.c.b16 %v983, %v980
        %v1011 = vpack.c.b16 %v984, %v981
        %v1012 = vpack.c.b16 %v988, %v985
        %v1013 = vpack.c.b16 %v989, %v986
        %v1014 = vpack.c.b16 %v990, %v987
        %1039 = vmatpush.bf16.msra.mxu0 %v1012
        %1040 = vmatpush.bf16.msra.mxu0 %v1009
        %1041 = vmatpush.bf16.msra.mxu0 %v1006
        %1042 = vmatpush.bf16.msra.mxu0 %v1003
        %1043 = vmatpush.bf16.msra.mxu0 %v1000
        %1044 = vmatpush.bf16.msra.mxu0 %v997
        %1045 = vmatpush.bf16.msra.mxu0 %v994
        %1046 = vmatpush.bf16.msra.mxu0 %v991
        %1047 = vmatmul.bf16.gmra.mxu0 %v903
        %v1048 = vpop.f32.mrf.mxu0
        %v1049 = vadd.f32 %v905, %v1048
        %v1050 = vpop.f32.mrf.mxu0
        %v1051 = vadd.f32 %v905, %v1050
        %1052 = vdwg.mxu0
        %1053 = vmatpush.bf16.msra.mxu0 %v1013
        %1054 = vmatpush.bf16.msra.mxu0 %v1010
        %1055 = vmatpush.bf16.msra.mxu0 %v1007
        %1056 = vmatpush.bf16.msra.mxu0 %v1004
        %1057 = vmatpush.bf16.msra.mxu0 %v1001
        %1058 = vmatpush.bf16.msra.mxu0 %v998
        %1059 = vmatpush.bf16.msra.mxu0 %v995
        %1060 = vmatpush.bf16.msra.mxu0 %v992
        %1061 = vmatmul.bf16.gmra.mxu0 %v903
        %v1062 = vpop.f32.mrf.mxu0
        %v1063 = vadd.f32 %v906, %v1062
        %v1064 = vpop.f32.mrf.mxu0
        %v1065 = vadd.f32 %v906, %v1064
        %1066 = vdwg.mxu0
        %1067 = vmatpush.bf16.msra.mxu0 %v1014
        %1068 = vmatpush.bf16.msra.mxu0 %v1011
        %1069 = vmatpush.bf16.msra.mxu0 %v1008
        %1070 = vmatpush.bf16.msra.mxu0 %v1005
        %1071 = vmatpush.bf16.msra.mxu0 %v1002
        %1072 = vmatpush.bf16.msra.mxu0 %v999
        %1073 = vmatpush.bf16.msra.mxu0 %v996
        %1074 = vmatpush.bf16.msra.mxu0 %v993
        %1075 = vmatmul.bf16.gmra.mxu0 %v903
        %v1076 = vpop.f32.mrf.mxu0
        %v1077 = vadd.f32 %v907, %v1076
        %v1078 = vpop.f32.mrf.mxu0
        %v1079 = vadd.f32 %v907, %v1078
        %1080 = vdwg.mxu0
        %v1081 = vlaneseq
        %v1082 = vand.u32 %v1081, 127
        %vm1083 = vcmp.lt.s32.totalorder %v1082, 6
        %v1084 = vsel %vm1083, 0.0, -1e+30
        %v1085 = vpack.c.bf16 %v1049, %v1049
        %v1086 = vpack.c.bf16 %v1051, %v1051
        %v1087 = vpack.c.bf16 %v1063, %v1063
        %v1088 = vpack.c.bf16 %v1065, %v1065
        %v1089 = vpack.c.bf16 %v1077, %v1077
        %v1090 = vpack.c.bf16 %v1079, %v1079
        %vm1091 = vcmask 261120
        %v1093 = vsel %vm1091, %v1085, 0
        %v1096 = vsel %vm1091, %v1087, 0
        %1098 = vmatpush.bf16.xpose.msra.mxu0 0
        %1099 = vmatpush.bf16.xpose.msra.mxu0 0
        %1100 = vmatpush.bf16.xpose.msra.mxu0 0
        %1101 = vmatpush.bf16.xpose.msra.mxu0 0
        %1102 = vmatpush.bf16.xpose.msra.mxu0 0
        %1103 = vmatpush.bf16.xpose.msra.mxu0 0
        %1104 = vmatpush.bf16.xpose.msra.mxu0 0
        %1105 = vmatpush.bf16.xpose.msra.mxu0 %v1096
        %1106 = vmatmul.bf16.gmra.mxu0 %v1093
        %v1107 = vpop.f32.mrf.mxu0
        %v1108 = vadd.f32 %v1084, %v1107
        %v1109 = vpop.f32.mrf.mxu0
        %1110 = vdwg.mxu0
        %v1112 = vsel %vm1091, %v1086, 0
        %v1115 = vsel %vm1091, %v1088, 0
        %1117 = vmatpush.bf16.xpose.msra.mxu0 0
        %1118 = vmatpush.bf16.xpose.msra.mxu0 0
        %1119 = vmatpush.bf16.xpose.msra.mxu0 0
        %1120 = vmatpush.bf16.xpose.msra.mxu0 0
        %1121 = vmatpush.bf16.xpose.msra.mxu0 0
        %1122 = vmatpush.bf16.xpose.msra.mxu0 0
        %1123 = vmatpush.bf16.xpose.msra.mxu0 0
        %1124 = vmatpush.bf16.xpose.msra.mxu0 %v1115
        %1125 = vmatmul.bf16.gmra.mxu0 %v1112
        %v1126 = vpop.f32.mrf.mxu0
        %v1127 = vadd.f32 %v1084, %v1126
        %v1128 = vpop.f32.mrf.mxu0
        %1129 = vdwg.mxu0
        %vm1130 = vcmask 64512
        %v1131 = vsel %vm1130, %v1108, -inf
        %1132 = vmax.xlane.f32.xlu0 %v1131
        %v1133 = vpop.xlane.xlu0 %1132
        %v1134 = vsel %vm1130, %v1127, -inf
        %1135 = vmax.xlane.f32.xlu0 %v1134
        %v1136 = vpop.xlane.xlu0 %1135
        %v1137 = vsub.f32 %v1108, %v1133
        %v1138 = vsub.f32 %v1127, %v1136
        %v1139 = vmul.f32 %v1137, 1.442695
        %v1140 = vpow.pop %v1139
        %v1141 = vmul.f32 %v1138, 1.442695
        %v1142 = vpow.pop %v1141
        %v1143 = vsel %vm1130, %v1140, 0.0
        %1144 = vadd.xlane.f32.xlu0 %v1143
        %v1145 = vpop.xlane.xlu0 %1144
        %v1146 = vsel %vm1130, %v1142, 0.0
        %1147 = vadd.xlane.f32.xlu0 %v1146
        %v1148 = vpop.xlane.xlu0 %1147
        %v1149 = vrcp.pop %v1145
        %v1150 = vrcp.pop %v1148
        %v1151 = vmul.f32 %v1140, %v1149
        %v1152 = vmul.f32 %v1142, %v1150
        %v1153 = vpack.c.bf16 %v1151, %v1151
        %v1154 = vpack.c.bf16 %v1152, %v1152
        %v1156 = vsel %vm1130, %v1153, 0
        %vm1158 = vcmask 1043456
        %v1160 = vsel %vm1158, %v1089, 0
        %1162 = vmatpush.bf16.msra.mxu0 0
        %1163 = vmatpush.bf16.msra.mxu0 0
        %1164 = vmatpush.bf16.msra.mxu0 0
        %1165 = vmatpush.bf16.msra.mxu0 0
        %1166 = vmatpush.bf16.msra.mxu0 0
        %1167 = vmatpush.bf16.msra.mxu0 0
        %1168 = vmatpush.bf16.msra.mxu0 0
        %1169 = vmatpush.bf16.msra.mxu0 %v1160
        %1170 = vmatmul.bf16.gmra.mxu0 %v1156
        %v1171 = vpop.f32.mrf.mxu0
        %v1172 = vadd.f32 0.0, %v1171
        %v1173 = vpop.f32.mrf.mxu0
        %1174 = vdwg.mxu0
        %v1176 = vsel %vm1130, %v1154, 0
        %v1179 = vsel %vm1158, %v1090, 0
        %1181 = vmatpush.bf16.msra.mxu0 0
        %1182 = vmatpush.bf16.msra.mxu0 0
        %1183 = vmatpush.bf16.msra.mxu0 0
        %1184 = vmatpush.bf16.msra.mxu0 0
        %1185 = vmatpush.bf16.msra.mxu0 0
        %1186 = vmatpush.bf16.msra.mxu0 0
        %1187 = vmatpush.bf16.msra.mxu0 0
        %1188 = vmatpush.bf16.msra.mxu0 %v1179
        %1189 = vmatmul.bf16.gmra.mxu0 %v1176
        %v1190 = vpop.f32.mrf.mxu0
        %v1191 = vadd.f32 0.0, %v1190
        %v1192 = vpop.f32.mrf.mxu0
        %1193 = vdwg.mxu0
        %v1195 = vunpack.c.l.b16 %v1085
        %v1196 = vpack.c.b16 %v1195, %v1195
        %1197 = vrot.lane.b32.xlu0 %v1196, 96
        %v1198 = vpop.permute.xlu0 %1197
        %v1200 = vunpack.c.l.b16 %v1087
        %v1201 = vpack.c.b16 %v1200, %v1200
        %1202 = vrot.lane.b32.xlu0 %v1201, 96
        %v1203 = vpop.permute.xlu0 %1202
        %v1205 = vsel %vm1091, %v1198, 0
        %v1208 = vsel %vm1091, %v1203, 0
        %1210 = vmatpush.bf16.xpose.msra.mxu0 0
        %1211 = vmatpush.bf16.xpose.msra.mxu0 0
        %1212 = vmatpush.bf16.xpose.msra.mxu0 0
        %1213 = vmatpush.bf16.xpose.msra.mxu0 0
        %1214 = vmatpush.bf16.xpose.msra.mxu0 0
        %1215 = vmatpush.bf16.xpose.msra.mxu0 0
        %1216 = vmatpush.bf16.xpose.msra.mxu0 0
        %1217 = vmatpush.bf16.xpose.msra.mxu0 %v1208
        %1218 = vmatmul.bf16.gmra.mxu0 %v1205
        %v1219 = vpop.f32.mrf.mxu0
        %v1220 = vadd.f32 %v1084, %v1219
        %v1221 = vpop.f32.mrf.mxu0
        %1222 = vdwg.mxu0
        %v1224 = vunpack.c.l.b16 %v1086
        %v1225 = vpack.c.b16 %v1224, %v1224
        %1226 = vrot.lane.b32.xlu0 %v1225, 96
        %v1227 = vpop.permute.xlu0 %1226
        %v1229 = vunpack.c.l.b16 %v1088
        %v1230 = vpack.c.b16 %v1229, %v1229
        %1231 = vrot.lane.b32.xlu0 %v1230, 96
        %v1232 = vpop.permute.xlu0 %1231
        %v1234 = vsel %vm1091, %v1227, 0
        %v1237 = vsel %vm1091, %v1232, 0
        %1239 = vmatpush.bf16.xpose.msra.mxu0 0
        %1240 = vmatpush.bf16.xpose.msra.mxu0 0
        %1241 = vmatpush.bf16.xpose.msra.mxu0 0
        %1242 = vmatpush.bf16.xpose.msra.mxu0 0
        %1243 = vmatpush.bf16.xpose.msra.mxu0 0
        %1244 = vmatpush.bf16.xpose.msra.mxu0 0
        %1245 = vmatpush.bf16.xpose.msra.mxu0 0
        %1246 = vmatpush.bf16.xpose.msra.mxu0 %v1237
        %1247 = vmatmul.bf16.gmra.mxu0 %v1234
        %v1248 = vpop.f32.mrf.mxu0
        %v1249 = vadd.f32 %v1084, %v1248
        %v1250 = vpop.f32.mrf.mxu0
        %1251 = vdwg.mxu0
        %v1252 = vsel %vm1130, %v1220, -inf
        %1253 = vmax.xlane.f32.xlu0 %v1252
        %v1254 = vpop.xlane.xlu0 %1253
        %v1255 = vsel %vm1130, %v1249, -inf
        %1256 = vmax.xlane.f32.xlu0 %v1255
        %v1257 = vpop.xlane.xlu0 %1256
        %v1258 = vsub.f32 %v1220, %v1254
        %v1259 = vsub.f32 %v1249, %v1257
        %v1260 = vmul.f32 %v1258, 1.442695
        %v1261 = vpow.pop %v1260
        %v1262 = vmul.f32 %v1259, 1.442695
        %v1263 = vpow.pop %v1262
        %v1264 = vsel %vm1130, %v1261, 0.0
        %1265 = vadd.xlane.f32.xlu0 %v1264
        %v1266 = vpop.xlane.xlu0 %1265
        %v1267 = vsel %vm1130, %v1263, 0.0
        %1268 = vadd.xlane.f32.xlu0 %v1267
        %v1269 = vpop.xlane.xlu0 %1268
        %v1270 = vrcp.pop %v1266
        %v1271 = vrcp.pop %v1269
        %v1272 = vmul.f32 %v1261, %v1270
        %v1273 = vmul.f32 %v1263, %v1271
        %v1274 = vpack.c.bf16 %v1272, %v1272
        %v1275 = vpack.c.bf16 %v1273, %v1273
        %v1277 = vunpack.c.l.b16 %v1089
        %v1278 = vpack.c.b16 %v1277, %v1277
        %1279 = vrot.lane.b32.xlu0 %v1278, 96
        %v1280 = vpop.permute.xlu0 %1279
        %v1282 = vsel %vm1130, %v1274, 0
        %v1285 = vsel %vm1158, %v1280, 0
        %1287 = vmatpush.bf16.msra.mxu0 0
        %1288 = vmatpush.bf16.msra.mxu0 0
        %1289 = vmatpush.bf16.msra.mxu0 0
        %1290 = vmatpush.bf16.msra.mxu0 0
        %1291 = vmatpush.bf16.msra.mxu0 0
        %1292 = vmatpush.bf16.msra.mxu0 0
        %1293 = vmatpush.bf16.msra.mxu0 0
        %1294 = vmatpush.bf16.msra.mxu0 %v1285
        %1295 = vmatmul.bf16.gmra.mxu0 %v1282
        %v1296 = vpop.f32.mrf.mxu0
        %v1297 = vadd.f32 0.0, %v1296
        %v1298 = vpop.f32.mrf.mxu0
        %1299 = vdwg.mxu0
        %v1301 = vunpack.c.l.b16 %v1090
        %v1302 = vpack.c.b16 %v1301, %v1301
        %1303 = vrot.lane.b32.xlu0 %v1302, 96
        %v1304 = vpop.permute.xlu0 %1303
        %v1306 = vsel %vm1130, %v1275, 0
        %v1309 = vsel %vm1158, %v1304, 0
        %1311 = vmatpush.bf16.msra.mxu0 0
        %1312 = vmatpush.bf16.msra.mxu0 0
        %1313 = vmatpush.bf16.msra.mxu0 0
        %1314 = vmatpush.bf16.msra.mxu0 0
        %1315 = vmatpush.bf16.msra.mxu0 0
        %1316 = vmatpush.bf16.msra.mxu0 0
        %1317 = vmatpush.bf16.msra.mxu0 0
        %1318 = vmatpush.bf16.msra.mxu0 %v1309
        %1319 = vmatmul.bf16.gmra.mxu0 %v1306
        %v1320 = vpop.f32.mrf.mxu0
        %v1321 = vadd.f32 0.0, %v1320
        %v1322 = vpop.f32.mrf.mxu0
        %1323 = vdwg.mxu0
        %1324 = vrot.lane.b32.xlu0 %v1196, 64
        %v1325 = vpop.permute.xlu0 %1324
        %1326 = vrot.lane.b32.xlu0 %v1201, 64
        %v1327 = vpop.permute.xlu0 %1326
        %v1329 = vsel %vm1091, %v1325, 0
        %v1332 = vsel %vm1091, %v1327, 0
        %1334 = vmatpush.bf16.xpose.msra.mxu0 0
        %1335 = vmatpush.bf16.xpose.msra.mxu0 0
        %1336 = vmatpush.bf16.xpose.msra.mxu0 0
        %1337 = vmatpush.bf16.xpose.msra.mxu0 0
        %1338 = vmatpush.bf16.xpose.msra.mxu0 0
        %1339 = vmatpush.bf16.xpose.msra.mxu0 0
        %1340 = vmatpush.bf16.xpose.msra.mxu0 0
        %1341 = vmatpush.bf16.xpose.msra.mxu0 %v1332
        %1342 = vmatmul.bf16.gmra.mxu0 %v1329
        %v1343 = vpop.f32.mrf.mxu0
        %v1344 = vadd.f32 %v1084, %v1343
        %v1345 = vpop.f32.mrf.mxu0
        %1346 = vdwg.mxu0
        %1347 = vrot.lane.b32.xlu0 %v1225, 64
        %v1348 = vpop.permute.xlu0 %1347
        %1349 = vrot.lane.b32.xlu0 %v1230, 64
        %v1350 = vpop.permute.xlu0 %1349
        %v1352 = vsel %vm1091, %v1348, 0
        %v1355 = vsel %vm1091, %v1350, 0
        %1357 = vmatpush.bf16.xpose.msra.mxu0 0
        %1358 = vmatpush.bf16.xpose.msra.mxu0 0
        %1359 = vmatpush.bf16.xpose.msra.mxu0 0
        %1360 = vmatpush.bf16.xpose.msra.mxu0 0
        %1361 = vmatpush.bf16.xpose.msra.mxu0 0
        %1362 = vmatpush.bf16.xpose.msra.mxu0 0
        %1363 = vmatpush.bf16.xpose.msra.mxu0 0
        %1364 = vmatpush.bf16.xpose.msra.mxu0 %v1355
        %1365 = vmatmul.bf16.gmra.mxu0 %v1352
        %v1366 = vpop.f32.mrf.mxu0
        %v1367 = vadd.f32 %v1084, %v1366
        %v1368 = vpop.f32.mrf.mxu0
        %1369 = vdwg.mxu0
        %v1370 = vsel %vm1130, %v1344, -inf
        %1371 = vmax.xlane.f32.xlu0 %v1370
        %v1372 = vpop.xlane.xlu0 %1371
        %v1373 = vsel %vm1130, %v1367, -inf
        %1374 = vmax.xlane.f32.xlu0 %v1373
        %v1375 = vpop.xlane.xlu0 %1374
        %v1376 = vsub.f32 %v1344, %v1372
        %v1377 = vsub.f32 %v1367, %v1375
        %v1378 = vmul.f32 %v1376, 1.442695
        %v1379 = vpow.pop %v1378
        %v1380 = vmul.f32 %v1377, 1.442695
        %v1381 = vpow.pop %v1380
        %v1382 = vsel %vm1130, %v1379, 0.0
        %1383 = vadd.xlane.f32.xlu0 %v1382
        %v1384 = vpop.xlane.xlu0 %1383
        %v1385 = vsel %vm1130, %v1381, 0.0
        %1386 = vadd.xlane.f32.xlu0 %v1385
        %v1387 = vpop.xlane.xlu0 %1386
        %v1388 = vrcp.pop %v1384
        %v1389 = vrcp.pop %v1387
        %v1390 = vmul.f32 %v1379, %v1388
        %v1391 = vmul.f32 %v1381, %v1389
        %v1392 = vpack.c.bf16 %v1390, %v1390
        %v1393 = vpack.c.bf16 %v1391, %v1391
        %1394 = vrot.lane.b32.xlu0 %v1278, 64
        %v1395 = vpop.permute.xlu0 %1394
        %v1397 = vsel %vm1130, %v1392, 0
        %v1400 = vsel %vm1158, %v1395, 0
        %1402 = vmatpush.bf16.msra.mxu0 0
        %1403 = vmatpush.bf16.msra.mxu0 0
        %1404 = vmatpush.bf16.msra.mxu0 0
        %1405 = vmatpush.bf16.msra.mxu0 0
        %1406 = vmatpush.bf16.msra.mxu0 0
        %1407 = vmatpush.bf16.msra.mxu0 0
        %1408 = vmatpush.bf16.msra.mxu0 0
        %1409 = vmatpush.bf16.msra.mxu0 %v1400
        %1410 = vmatmul.bf16.gmra.mxu0 %v1397
        %v1411 = vpop.f32.mrf.mxu0
        %v1412 = vadd.f32 0.0, %v1411
        %v1413 = vpop.f32.mrf.mxu0
        %1414 = vdwg.mxu0
        %1415 = vrot.lane.b32.xlu0 %v1302, 64
        %v1416 = vpop.permute.xlu0 %1415
        %v1418 = vsel %vm1130, %v1393, 0
        %v1421 = vsel %vm1158, %v1416, 0
        %1423 = vmatpush.bf16.msra.mxu0 0
        %1424 = vmatpush.bf16.msra.mxu0 0
        %1425 = vmatpush.bf16.msra.mxu0 0
        %1426 = vmatpush.bf16.msra.mxu0 0
        %1427 = vmatpush.bf16.msra.mxu0 0
        %1428 = vmatpush.bf16.msra.mxu0 0
        %1429 = vmatpush.bf16.msra.mxu0 0
        %1430 = vmatpush.bf16.msra.mxu0 %v1421
        %1431 = vmatmul.bf16.gmra.mxu0 %v1418
        %v1432 = vpop.f32.mrf.mxu0
        %v1433 = vadd.f32 0.0, %v1432
        %v1434 = vpop.f32.mrf.mxu0
        %1435 = vdwg.mxu0
        %1436 = vrot.lane.b32.xlu0 %v1196, 32
        %v1437 = vpop.permute.xlu0 %1436
        %1438 = vrot.lane.b32.xlu0 %v1201, 32
        %v1439 = vpop.permute.xlu0 %1438
        %v1441 = vsel %vm1091, %v1437, 0
        %v1444 = vsel %vm1091, %v1439, 0
        %1446 = vmatpush.bf16.xpose.msra.mxu0 0
        %1447 = vmatpush.bf16.xpose.msra.mxu0 0
        %1448 = vmatpush.bf16.xpose.msra.mxu0 0
        %1449 = vmatpush.bf16.xpose.msra.mxu0 0
        %1450 = vmatpush.bf16.xpose.msra.mxu0 0
        %1451 = vmatpush.bf16.xpose.msra.mxu0 0
        %1452 = vmatpush.bf16.xpose.msra.mxu0 0
        %1453 = vmatpush.bf16.xpose.msra.mxu0 %v1444
        %1454 = vmatmul.bf16.gmra.mxu0 %v1441
        %v1455 = vpop.f32.mrf.mxu0
        %v1456 = vadd.f32 %v1084, %v1455
        %v1457 = vpop.f32.mrf.mxu0
        %1458 = vdwg.mxu0
        %1459 = vrot.lane.b32.xlu0 %v1225, 32
        %v1460 = vpop.permute.xlu0 %1459
        %1461 = vrot.lane.b32.xlu0 %v1230, 32
        %v1462 = vpop.permute.xlu0 %1461
        %v1464 = vsel %vm1091, %v1460, 0
        %v1467 = vsel %vm1091, %v1462, 0
        %1469 = vmatpush.bf16.xpose.msra.mxu0 0
        %1470 = vmatpush.bf16.xpose.msra.mxu0 0
        %1471 = vmatpush.bf16.xpose.msra.mxu0 0
        %1472 = vmatpush.bf16.xpose.msra.mxu0 0
        %1473 = vmatpush.bf16.xpose.msra.mxu0 0
        %1474 = vmatpush.bf16.xpose.msra.mxu0 0
        %1475 = vmatpush.bf16.xpose.msra.mxu0 0
        %1476 = vmatpush.bf16.xpose.msra.mxu0 %v1467
        %1477 = vmatmul.bf16.gmra.mxu0 %v1464
        %v1478 = vpop.f32.mrf.mxu0
        %v1479 = vadd.f32 %v1084, %v1478
        %v1480 = vpop.f32.mrf.mxu0
        %1481 = vdwg.mxu0
        %v1482 = vsel %vm1130, %v1456, -inf
        %1483 = vmax.xlane.f32.xlu0 %v1482
        %v1484 = vpop.xlane.xlu0 %1483
        %v1485 = vsel %vm1130, %v1479, -inf
        %1486 = vmax.xlane.f32.xlu0 %v1485
        %v1487 = vpop.xlane.xlu0 %1486
        %v1488 = vsub.f32 %v1456, %v1484
        %v1489 = vsub.f32 %v1479, %v1487
        %v1490 = vmul.f32 %v1488, 1.442695
        %v1491 = vpow.pop %v1490
        %v1492 = vmul.f32 %v1489, 1.442695
        %v1493 = vpow.pop %v1492
        %v1494 = vsel %vm1130, %v1491, 0.0
        %1495 = vadd.xlane.f32.xlu0 %v1494
        %v1496 = vpop.xlane.xlu0 %1495
        %v1497 = vsel %vm1130, %v1493, 0.0
        %1498 = vadd.xlane.f32.xlu0 %v1497
        %v1499 = vpop.xlane.xlu0 %1498
        %v1500 = vrcp.pop %v1496
        %v1501 = vrcp.pop %v1499
        %v1502 = vmul.f32 %v1491, %v1500
        %v1503 = vmul.f32 %v1493, %v1501
        %v1504 = vpack.c.bf16 %v1502, %v1502
        %v1505 = vpack.c.bf16 %v1503, %v1503
        %1506 = vrot.lane.b32.xlu0 %v1278, 32
        %v1507 = vpop.permute.xlu0 %1506
        %v1509 = vsel %vm1130, %v1504, 0
        %v1512 = vsel %vm1158, %v1507, 0
        %1514 = vmatpush.bf16.msra.mxu0 0
        %1515 = vmatpush.bf16.msra.mxu0 0
        %1516 = vmatpush.bf16.msra.mxu0 0
        %1517 = vmatpush.bf16.msra.mxu0 0
        %1518 = vmatpush.bf16.msra.mxu0 0
        %1519 = vmatpush.bf16.msra.mxu0 0
        %1520 = vmatpush.bf16.msra.mxu0 0
        %1521 = vmatpush.bf16.msra.mxu0 %v1512
        %1522 = vmatmul.bf16.gmra.mxu0 %v1509
        %v1523 = vpop.f32.mrf.mxu0
        %v1524 = vadd.f32 0.0, %v1523
        %v1525 = vpop.f32.mrf.mxu0
        %1526 = vdwg.mxu0
        %1527 = vrot.lane.b32.xlu0 %v1302, 32
        %v1528 = vpop.permute.xlu0 %1527
        %v1530 = vsel %vm1130, %v1505, 0
        %v1533 = vsel %vm1158, %v1528, 0
        %1535 = vmatpush.bf16.msra.mxu0 0
        %1536 = vmatpush.bf16.msra.mxu0 0
        %1537 = vmatpush.bf16.msra.mxu0 0
        %1538 = vmatpush.bf16.msra.mxu0 0
        %1539 = vmatpush.bf16.msra.mxu0 0
        %1540 = vmatpush.bf16.msra.mxu0 0
        %1541 = vmatpush.bf16.msra.mxu0 0
        %1542 = vmatpush.bf16.msra.mxu0 %v1533
        %1543 = vmatmul.bf16.gmra.mxu0 %v1530
        %v1544 = vpop.f32.mrf.mxu0
        %v1545 = vadd.f32 0.0, %v1544
        %v1546 = vpop.f32.mrf.mxu0
        %1547 = vdwg.mxu0
        %1550 = vrot.lane.b32.xlu0 %v1297, 32
        %v1551 = vpop.permute.xlu0 %1550
        %1552 = vrot.lane.b32.xlu0 %v1321, 32
        %v1553 = vpop.permute.xlu0 %1552
        %1558 = vrot.lane.b32.xlu0 %v1412, 64
        %v1559 = vpop.permute.xlu0 %1558
        %1560 = vrot.lane.b32.xlu0 %v1433, 64
        %v1561 = vpop.permute.xlu0 %1560
        %1566 = vrot.lane.b32.xlu0 %v1524, 96
        %v1567 = vpop.permute.xlu0 %1566
        %1568 = vrot.lane.b32.xlu0 %v1545, 96
        %v1569 = vpop.permute.xlu0 %1568
        %v1572 = vsel %vm1091, %v1172, %v1551
        %v1573 = vsel %vm1091, %v1191, %v1553
        %vm1574 = vcmask 523264
        %v1575 = vsel %vm1574, %v1572, %v1559
        %v1576 = vsel %vm1574, %v1573, %v1561
        %vm1577 = vcmask 785408
        %v1578 = vsel %vm1577, %v1575, %v1567
        %v1579 = vsel %vm1577, %v1576, %v1569
        %v1580 = vpack.c.bf16 %v1579, %v1578
        %v1581 = vperm.slane %v900, 0
        %v1598 = vunpack.c.l.b16 %v787
        %v1599 = vunpack.c.l.b16 %v788
        %v1600 = vunpack.c.l.b16 %v789
        %v1601 = vunpack.c.l.b16 %v790
        %v1602 = vunpack.c.l.b16 %v791
        %v1603 = vunpack.c.l.b16 %v792
        %v1604 = vunpack.c.l.b16 %v793
        %v1605 = vunpack.c.l.b16 %v794
        %v1606 = vunpack.c.l.b16 %v795
        %v1607 = vunpack.c.l.b16 %v796
        %v1608 = vunpack.c.l.b16 %v797
        %v1609 = vunpack.c.l.b16 %v798
        %v1610 = vunpack.c.l.b16 %v799
        %v1611 = vunpack.c.l.b16 %v800
        %v1612 = vunpack.c.l.b16 %v801
        %v1613 = vunpack.c.l.b16 %v802
        %v1614 = vpack.c.b16 %v1599, %v1598
        %v1615 = vpack.c.b16 %v1601, %v1600
        %v1616 = vpack.c.b16 %v1603, %v1602
        %v1617 = vpack.c.b16 %v1605, %v1604
        %v1618 = vpack.c.b16 %v1607, %v1606
        %v1619 = vpack.c.b16 %v1609, %v1608
        %v1620 = vpack.c.b16 %v1611, %v1610
        %v1621 = vpack.c.b16 %v1613, %v1612
        %1630 = vmatpush.bf16.msra.mxu0 %v1621
        %1631 = vmatpush.bf16.msra.mxu0 %v1620
        %1632 = vmatpush.bf16.msra.mxu0 %v1619
        %1633 = vmatpush.bf16.msra.mxu0 %v1618
        %1634 = vmatpush.bf16.msra.mxu0 %v1617
        %1635 = vmatpush.bf16.msra.mxu0 %v1616
        %1636 = vmatpush.bf16.msra.mxu0 %v1615
        %1637 = vmatpush.bf16.msra.mxu0 %v1614
        %1638 = vmatmul.bf16.gmra.mxu0 %v1580
        %v1639 = vpop.f32.mrf.mxu0
        %v1640 = vadd.f32 %v1581, %v1639
        %v1641 = vpop.f32.mrf.mxu0
        %v1642 = vadd.f32 %v1581, %v1641
        %1643 = vdwg.mxu0
        %v1644 = vadd.f32 %v901, %v1640
        %v1645 = vadd.f32 %v902, %v1642
        %1646 = vadd.xlane.f32.xlu0 %v1644
        %v1647 = vpop.xlane.xlu0 %1646
        %1648 = vadd.xlane.f32.xlu0 %v1645
        %v1649 = vpop.xlane.xlu0 %1648
        %v1650 = vrcp.pop 128.0
        %v1651 = vmul.f32 128.0, %v1650
        %v1652 = vsub.f32 1.0, %v1651
        %v1653 = vmul.f32 %v1650, %v1652
        %v1654 = vadd.f32 %v1650, %v1653
        %vm1655 = vweird.f32 %v1650
        %v1656 = vsel %vm1655, %v1650, %v1654
        %v1657 = vmul.f32 %v1647, %v1656
        %v1658 = vmul.f32 %v1649, %v1656
        %v1659 = vsub.f32 %v1644, %v1657
        %v1660 = vsub.f32 %v1645, %v1658
        %v1661 = vmul.f32 %v1659, %v1659
        %v1662 = vmul.f32 %v1660, %v1660
        %1663 = vadd.xlane.f32.xlu0 %v1661
        %v1664 = vpop.xlane.xlu0 %1663
        %1665 = vadd.xlane.f32.xlu0 %v1662
        %v1666 = vpop.xlane.xlu0 %1665
        %v1667 = vmul.f32 %v1664, %v1656
        %v1668 = vmul.f32 %v1666, %v1656
        %v1669 = vadd.f32 %v1667, 1e-05
        %v1670 = vadd.f32 %v1668, 1e-05
        %v1671 = vrsqrt.pop %v1669
        %v1672 = vmul.f32 %v1671, %v1669
        %v1673 = vmul.f32 %v1672, %v1671
        %v1674 = vmul.f32 0.5, %v1673
        %v1675 = vsub.f32 1.5, %v1674
        %v1676 = vmul.f32 %v1671, %v1675
        %vm1677 = vweird.f32 %v1669
        %vm1678 = vweird.f32 %v1671
        %vm1679 = vmor %vm1677, %vm1678
        %v1680 = vsel %vm1679, %v1671, %v1676
        %v1681 = vrsqrt.pop %v1670
        %v1682 = vmul.f32 %v1681, %v1670
        %v1683 = vmul.f32 %v1682, %v1681
        %v1684 = vmul.f32 0.5, %v1683
        %v1685 = vsub.f32 1.5, %v1684
        %v1686 = vmul.f32 %v1681, %v1685
        %vm1687 = vweird.f32 %v1670
        %vm1688 = vweird.f32 %v1681
        %vm1689 = vmor %vm1687, %vm1688
        %v1690 = vsel %vm1689, %v1681, %v1686
        %v1691 = vmul.f32 %v1659, %v1680
        %v1692 = vmul.f32 %v1660, %v1690
        %v1693 = vperm.slane %v900, 2
        %v1694 = vmul.f32 %v1691, %v1693
        %v1695 = vmul.f32 %v1692, %v1693
        %v1696 = vperm.slane %v900, 3
        %v1697 = vadd.f32 %v1694, %v1696
        %v1698 = vadd.f32 %v1695, %v1696
        %v1699 = vpack.c.bf16 %v1698, %v1697
        %v1701 = vperm.slane %v835, 0
        %v1702 = vperm.slane %v835, 1
        %v1703 = vperm.slane %v835, 2
        %v1704 = vperm.slane %v835, 3
        %v1741 = vunpack.c.l.b16 %v803
        %v1742 = vunpack.c.h.b16 %v803
        %v1743 = vunpack.c.l.b16 %v804
        %v1744 = vunpack.c.h.b16 %v804
        %v1745 = vunpack.c.l.b16 %v805
        %v1746 = vunpack.c.h.b16 %v805
        %v1747 = vunpack.c.l.b16 %v806
        %v1748 = vunpack.c.h.b16 %v806
        %v1749 = vunpack.c.l.b16 %v807
        %v1750 = vunpack.c.h.b16 %v807
        %v1751 = vunpack.c.l.b16 %v808
        %v1752 = vunpack.c.h.b16 %v808
        %v1753 = vunpack.c.l.b16 %v809
        %v1754 = vunpack.c.h.b16 %v809
        %v1755 = vunpack.c.l.b16 %v810
        %v1756 = vunpack.c.h.b16 %v810
        %v1757 = vunpack.c.l.b16 %v811
        %v1758 = vunpack.c.h.b16 %v811
        %v1759 = vunpack.c.l.b16 %v812
        %v1760 = vunpack.c.h.b16 %v812
        %v1761 = vunpack.c.l.b16 %v813
        %v1762 = vunpack.c.h.b16 %v813
        %v1763 = vunpack.c.l.b16 %v814
        %v1764 = vunpack.c.h.b16 %v814
        %v1765 = vunpack.c.l.b16 %v815
        %v1766 = vunpack.c.h.b16 %v815
        %v1767 = vunpack.c.l.b16 %v816
        %v1768 = vunpack.c.h.b16 %v816
        %v1769 = vunpack.c.l.b16 %v817
        %v1770 = vunpack.c.h.b16 %v817
        %v1771 = vunpack.c.l.b16 %v818
        %v1772 = vunpack.c.h.b16 %v818
        %v1773 = vunpack.c.l.b16 %v819
        %v1774 = vunpack.c.h.b16 %v819
        %v1775 = vunpack.c.l.b16 %v820
        %v1776 = vunpack.c.h.b16 %v820
        %v1777 = vunpack.c.l.b16 %v821
        %v1778 = vunpack.c.h.b16 %v821
        %v1779 = vunpack.c.l.b16 %v822
        %v1780 = vunpack.c.h.b16 %v822
        %v1781 = vunpack.c.l.b16 %v823
        %v1782 = vunpack.c.h.b16 %v823
        %v1783 = vunpack.c.l.b16 %v824
        %v1784 = vunpack.c.h.b16 %v824
        %v1785 = vunpack.c.l.b16 %v825
        %v1786 = vunpack.c.h.b16 %v825
        %v1787 = vunpack.c.l.b16 %v826
        %v1788 = vunpack.c.h.b16 %v826
        %v1789 = vunpack.c.l.b16 %v827
        %v1790 = vunpack.c.h.b16 %v827
        %v1791 = vunpack.c.l.b16 %v828
        %v1792 = vunpack.c.h.b16 %v828
        %v1793 = vunpack.c.l.b16 %v829
        %v1794 = vunpack.c.h.b16 %v829
        %v1795 = vunpack.c.l.b16 %v830
        %v1796 = vunpack.c.h.b16 %v830
        %v1797 = vunpack.c.l.b16 %v831
        %v1798 = vunpack.c.h.b16 %v831
        %v1799 = vunpack.c.l.b16 %v832
        %v1800 = vunpack.c.h.b16 %v832
        %v1801 = vunpack.c.l.b16 %v833
        %v1802 = vunpack.c.h.b16 %v833
        %v1803 = vunpack.c.l.b16 %v834
        %v1804 = vunpack.c.h.b16 %v834
        %v1805 = vpack.c.b16 %v1745, %v1741
        %v1806 = vpack.c.b16 %v1746, %v1742
        %v1807 = vpack.c.b16 %v1747, %v1743
        %v1808 = vpack.c.b16 %v1748, %v1744
        %v1809 = vpack.c.b16 %v1753, %v1749
        %v1810 = vpack.c.b16 %v1754, %v1750
        %v1811 = vpack.c.b16 %v1755, %v1751
        %v1812 = vpack.c.b16 %v1756, %v1752
        %v1813 = vpack.c.b16 %v1761, %v1757
        %v1814 = vpack.c.b16 %v1762, %v1758
        %v1815 = vpack.c.b16 %v1763, %v1759
        %v1816 = vpack.c.b16 %v1764, %v1760
        %v1817 = vpack.c.b16 %v1769, %v1765
        %v1818 = vpack.c.b16 %v1770, %v1766
        %v1819 = vpack.c.b16 %v1771, %v1767
        %v1820 = vpack.c.b16 %v1772, %v1768
        %v1821 = vpack.c.b16 %v1777, %v1773
        %v1822 = vpack.c.b16 %v1778, %v1774
        %v1823 = vpack.c.b16 %v1779, %v1775
        %v1824 = vpack.c.b16 %v1780, %v1776
        %v1825 = vpack.c.b16 %v1785, %v1781
        %v1826 = vpack.c.b16 %v1786, %v1782
        %v1827 = vpack.c.b16 %v1787, %v1783
        %v1828 = vpack.c.b16 %v1788, %v1784
        %v1829 = vpack.c.b16 %v1793, %v1789
        %v1830 = vpack.c.b16 %v1794, %v1790
        %v1831 = vpack.c.b16 %v1795, %v1791
        %v1832 = vpack.c.b16 %v1796, %v1792
        %v1833 = vpack.c.b16 %v1801, %v1797
        %v1834 = vpack.c.b16 %v1802, %v1798
        %v1835 = vpack.c.b16 %v1803, %v1799
        %v1836 = vpack.c.b16 %v1804, %v1800
        %1869 = vmatpush.bf16.msra.mxu0 %v1833
        %1870 = vmatpush.bf16.msra.mxu0 %v1829
        %1871 = vmatpush.bf16.msra.mxu0 %v1825
        %1872 = vmatpush.bf16.msra.mxu0 %v1821
        %1873 = vmatpush.bf16.msra.mxu0 %v1817
        %1874 = vmatpush.bf16.msra.mxu0 %v1813
        %1875 = vmatpush.bf16.msra.mxu0 %v1809
        %1876 = vmatpush.bf16.msra.mxu0 %v1805
        %1877 = vmatmul.bf16.gmra.mxu0 %v1699
        %v1878 = vpop.f32.mrf.mxu0
        %v1879 = vadd.f32 %v1701, %v1878
        %v1880 = vpop.f32.mrf.mxu0
        %v1881 = vadd.f32 %v1701, %v1880
        %1882 = vdwg.mxu0
        %1883 = vmatpush.bf16.msra.mxu0 %v1834
        %1884 = vmatpush.bf16.msra.mxu0 %v1830
        %1885 = vmatpush.bf16.msra.mxu0 %v1826
        %1886 = vmatpush.bf16.msra.mxu0 %v1822
        %1887 = vmatpush.bf16.msra.mxu0 %v1818
        %1888 = vmatpush.bf16.msra.mxu0 %v1814
        %1889 = vmatpush.bf16.msra.mxu0 %v1810
        %1890 = vmatpush.bf16.msra.mxu0 %v1806
        %1891 = vmatmul.bf16.gmra.mxu0 %v1699
        %v1892 = vpop.f32.mrf.mxu0
        %v1893 = vadd.f32 %v1702, %v1892
        %v1894 = vpop.f32.mrf.mxu0
        %v1895 = vadd.f32 %v1702, %v1894
        %1896 = vdwg.mxu0
        %1897 = vmatpush.bf16.msra.mxu0 %v1835
        %1898 = vmatpush.bf16.msra.mxu0 %v1831
        %1899 = vmatpush.bf16.msra.mxu0 %v1827
        %1900 = vmatpush.bf16.msra.mxu0 %v1823
        %1901 = vmatpush.bf16.msra.mxu0 %v1819
        %1902 = vmatpush.bf16.msra.mxu0 %v1815
        %1903 = vmatpush.bf16.msra.mxu0 %v1811
        %1904 = vmatpush.bf16.msra.mxu0 %v1807
        %1905 = vmatmul.bf16.gmra.mxu0 %v1699
        %v1906 = vpop.f32.mrf.mxu0
        %v1907 = vadd.f32 %v1703, %v1906
        %v1908 = vpop.f32.mrf.mxu0
        %v1909 = vadd.f32 %v1703, %v1908
        %1910 = vdwg.mxu0
        %1911 = vmatpush.bf16.msra.mxu0 %v1836
        %1912 = vmatpush.bf16.msra.mxu0 %v1832
        %1913 = vmatpush.bf16.msra.mxu0 %v1828
        %1914 = vmatpush.bf16.msra.mxu0 %v1824
        %1915 = vmatpush.bf16.msra.mxu0 %v1820
        %1916 = vmatpush.bf16.msra.mxu0 %v1816
        %1917 = vmatpush.bf16.msra.mxu0 %v1812
        %1918 = vmatpush.bf16.msra.mxu0 %v1808
        %1919 = vmatmul.bf16.gmra.mxu0 %v1699
        %v1920 = vpop.f32.mrf.mxu0
        %v1921 = vadd.f32 %v1704, %v1920
        %v1922 = vpop.f32.mrf.mxu0
        %v1923 = vadd.f32 %v1704, %v1922
        %1924 = vdwg.mxu0
        %v1925 = vmul.f32 %v1879, %v1879
        %v1926 = vmul.f32 %v1893, %v1893
        %v1927 = vmul.f32 %v1907, %v1907
        %v1928 = vmul.f32 %v1921, %v1921
        %v1929 = vmul.f32 %v1881, %v1881
        %v1930 = vmul.f32 %v1895, %v1895
        %v1931 = vmul.f32 %v1909, %v1909
        %v1932 = vmul.f32 %v1923, %v1923
        %v1933 = vmul.f32 %v1879, %v1925
        %v1934 = vmul.f32 %v1893, %v1926
        %v1935 = vmul.f32 %v1907, %v1927
        %v1936 = vmul.f32 %v1921, %v1928
        %v1937 = vmul.f32 %v1881, %v1929
        %v1938 = vmul.f32 %v1895, %v1930
        %v1939 = vmul.f32 %v1909, %v1931
        %v1940 = vmul.f32 %v1923, %v1932
        %v1941 = vmul.f32 %v1933, 0.044715
        %v1942 = vmul.f32 %v1934, 0.044715
        %v1943 = vmul.f32 %v1935, 0.044715
        %v1944 = vmul.f32 %v1936, 0.044715
        %v1945 = vmul.f32 %v1937, 0.044715
        %v1946 = vmul.f32 %v1938, 0.044715
        %v1947 = vmul.f32 %v1939, 0.044715
        %v1948 = vmul.f32 %v1940, 0.044715
        %v1949 = vadd.f32 %v1879, %v1941
        %v1950 = vadd.f32 %v1893, %v1942
        %v1951 = vadd.f32 %v1907, %v1943
        %v1952 = vadd.f32 %v1921, %v1944
        %v1953 = vadd.f32 %v1881, %v1945
        %v1954 = vadd.f32 %v1895, %v1946
        %v1955 = vadd.f32 %v1909, %v1947
        %v1956 = vadd.f32 %v1923, %v1948
        %v1957 = vmul.f32 %v1949, 0.7978846
        %v1958 = vmul.f32 %v1950, 0.7978846
        %v1959 = vmul.f32 %v1951, 0.7978846
        %v1960 = vmul.f32 %v1952, 0.7978846
        %v1961 = vmul.f32 %v1953, 0.7978846
        %v1962 = vmul.f32 %v1954, 0.7978846
        %v1963 = vmul.f32 %v1955, 0.7978846
        %v1964 = vmul.f32 %v1956, 0.7978846
        %v1965 = vtanh.pop %v1957
        %v1966 = vtanh.pop %v1958
        %v1967 = vtanh.pop %v1959
        %v1968 = vtanh.pop %v1960
        %v1969 = vtanh.pop %v1961
        %v1970 = vtanh.pop %v1962
        %v1971 = vtanh.pop %v1963
        %v1972 = vtanh.pop %v1964
        %v1973 = vadd.f32 %v1965, 1.0
        %v1974 = vadd.f32 %v1966, 1.0
        %v1975 = vadd.f32 %v1967, 1.0
        %v1976 = vadd.f32 %v1968, 1.0
        %v1977 = vadd.f32 %v1969, 1.0
        %v1978 = vadd.f32 %v1970, 1.0
        %v1979 = vadd.f32 %v1971, 1.0
        %v1980 = vadd.f32 %v1972, 1.0
        %v1981 = vmul.f32 %v1973, 0.5
        %v1982 = vmul.f32 %v1974, 0.5
        %v1983 = vmul.f32 %v1975, 0.5
        %v1984 = vmul.f32 %v1976, 0.5
        %v1985 = vmul.f32 %v1977, 0.5
        %v1986 = vmul.f32 %v1978, 0.5
        %v1987 = vmul.f32 %v1979, 0.5
        %v1988 = vmul.f32 %v1980, 0.5
        %v1989 = vmul.f32 %v1879, %v1981
        %v1990 = vmul.f32 %v1893, %v1982
        %v1991 = vmul.f32 %v1907, %v1983
        %v1992 = vmul.f32 %v1921, %v1984
        %v1993 = vmul.f32 %v1881, %v1985
        %v1994 = vmul.f32 %v1895, %v1986
        %v1995 = vmul.f32 %v1909, %v1987
        %v1996 = vmul.f32 %v1923, %v1988
        %v1997 = vpack.c.bf16 %v1993, %v1989
        %v1998 = vpack.c.bf16 %v1994, %v1990
        %v1999 = vpack.c.bf16 %v1995, %v1991
        %v2000 = vpack.c.bf16 %v1996, %v1992
        %v2001 = vperm.slane %v900, 1
        %v2066 = vunpack.c.l.b16 %v836
        %v2067 = vunpack.c.l.b16 %v837
        %v2068 = vunpack.c.l.b16 %v838
        %v2069 = vunpack.c.l.b16 %v839
        %v2070 = vunpack.c.l.b16 %v840
        %v2071 = vunpack.c.l.b16 %v841
        %v2072 = vunpack.c.l.b16 %v842
        %v2073 = vunpack.c.l.b16 %v843
        %v2074 = vunpack.c.l.b16 %v844
        %v2075 = vunpack.c.l.b16 %v845
        %v2076 = vunpack.c.l.b16 %v846
        %v2077 = vunpack.c.l.b16 %v847
        %v2078 = vunpack.c.l.b16 %v848
        %v2079 = vunpack.c.l.b16 %v849
        %v2080 = vunpack.c.l.b16 %v850
        %v2081 = vunpack.c.l.b16 %v851
        %v2082 = vunpack.c.l.b16 %v852
        %v2083 = vunpack.c.l.b16 %v853
        %v2084 = vunpack.c.l.b16 %v854
        %v2085 = vunpack.c.l.b16 %v855
        %v2086 = vunpack.c.l.b16 %v856
        %v2087 = vunpack.c.l.b16 %v857
        %v2088 = vunpack.c.l.b16 %v858
        %v2089 = vunpack.c.l.b16 %v859
        %v2090 = vunpack.c.l.b16 %v860
        %v2091 = vunpack.c.l.b16 %v861
        %v2092 = vunpack.c.l.b16 %v862
        %v2093 = vunpack.c.l.b16 %v863
        %v2094 = vunpack.c.l.b16 %v864
        %v2095 = vunpack.c.l.b16 %v865
        %v2096 = vunpack.c.l.b16 %v866
        %v2097 = vunpack.c.l.b16 %v867
        %v2098 = vunpack.c.l.b16 %v868
        %v2099 = vunpack.c.l.b16 %v869
        %v2100 = vunpack.c.l.b16 %v870
        %v2101 = vunpack.c.l.b16 %v871
        %v2102 = vunpack.c.l.b16 %v872
        %v2103 = vunpack.c.l.b16 %v873
        %v2104 = vunpack.c.l.b16 %v874
        %v2105 = vunpack.c.l.b16 %v875
        %v2106 = vunpack.c.l.b16 %v876
        %v2107 = vunpack.c.l.b16 %v877
        %v2108 = vunpack.c.l.b16 %v878
        %v2109 = vunpack.c.l.b16 %v879
        %v2110 = vunpack.c.l.b16 %v880
        %v2111 = vunpack.c.l.b16 %v881
        %v2112 = vunpack.c.l.b16 %v882
        %v2113 = vunpack.c.l.b16 %v883
        %v2114 = vunpack.c.l.b16 %v884
        %v2115 = vunpack.c.l.b16 %v885
        %v2116 = vunpack.c.l.b16 %v886
        %v2117 = vunpack.c.l.b16 %v887
        %v2118 = vunpack.c.l.b16 %v888
        %v2119 = vunpack.c.l.b16 %v889
        %v2120 = vunpack.c.l.b16 %v890
        %v2121 = vunpack.c.l.b16 %v891
        %v2122 = vunpack.c.l.b16 %v892
        %v2123 = vunpack.c.l.b16 %v893
        %v2124 = vunpack.c.l.b16 %v894
        %v2125 = vunpack.c.l.b16 %v895
        %v2126 = vunpack.c.l.b16 %v896
        %v2127 = vunpack.c.l.b16 %v897
        %v2128 = vunpack.c.l.b16 %v898
        %v2129 = vunpack.c.l.b16 %v899
        %v2130 = vpack.c.b16 %v2067, %v2066
        %v2131 = vpack.c.b16 %v2069, %v2068
        %v2132 = vpack.c.b16 %v2071, %v2070
        %v2133 = vpack.c.b16 %v2073, %v2072
        %v2134 = vpack.c.b16 %v2075, %v2074
        %v2135 = vpack.c.b16 %v2077, %v2076
        %v2136 = vpack.c.b16 %v2079, %v2078
        %v2137 = vpack.c.b16 %v2081, %v2080
        %v2138 = vpack.c.b16 %v2083, %v2082
        %v2139 = vpack.c.b16 %v2085, %v2084
        %v2140 = vpack.c.b16 %v2087, %v2086
        %v2141 = vpack.c.b16 %v2089, %v2088
        %v2142 = vpack.c.b16 %v2091, %v2090
        %v2143 = vpack.c.b16 %v2093, %v2092
        %v2144 = vpack.c.b16 %v2095, %v2094
        %v2145 = vpack.c.b16 %v2097, %v2096
        %v2146 = vpack.c.b16 %v2099, %v2098
        %v2147 = vpack.c.b16 %v2101, %v2100
        %v2148 = vpack.c.b16 %v2103, %v2102
        %v2149 = vpack.c.b16 %v2105, %v2104
        %v2150 = vpack.c.b16 %v2107, %v2106
        %v2151 = vpack.c.b16 %v2109, %v2108
        %v2152 = vpack.c.b16 %v2111, %v2110
        %v2153 = vpack.c.b16 %v2113, %v2112
        %v2154 = vpack.c.b16 %v2115, %v2114
        %v2155 = vpack.c.b16 %v2117, %v2116
        %v2156 = vpack.c.b16 %v2119, %v2118
        %v2157 = vpack.c.b16 %v2121, %v2120
        %v2158 = vpack.c.b16 %v2123, %v2122
        %v2159 = vpack.c.b16 %v2125, %v2124
        %v2160 = vpack.c.b16 %v2127, %v2126
        %v2161 = vpack.c.b16 %v2129, %v2128
        %2194 = vmatpush.bf16.msra.mxu0 %v2137
        %2195 = vmatpush.bf16.msra.mxu0 %v2136
        %2196 = vmatpush.bf16.msra.mxu0 %v2135
        %2197 = vmatpush.bf16.msra.mxu0 %v2134
        %2198 = vmatpush.bf16.msra.mxu0 %v2133
        %2199 = vmatpush.bf16.msra.mxu0 %v2132
        %2200 = vmatpush.bf16.msra.mxu0 %v2131
        %2201 = vmatpush.bf16.msra.mxu0 %v2130
        %2202 = vmatmul.bf16.gmra.mxu0 %v1997
        %v2203 = vpop.f32.mrf.mxu0
        %v2204 = vadd.f32 %v2001, %v2203
        %v2205 = vpop.f32.mrf.mxu0
        %v2206 = vadd.f32 %v2001, %v2205
        %2207 = vdwg.mxu0
        %2208 = vmatpush.bf16.msra.mxu0 %v2145
        %2209 = vmatpush.bf16.msra.mxu0 %v2144
        %2210 = vmatpush.bf16.msra.mxu0 %v2143
        %2211 = vmatpush.bf16.msra.mxu0 %v2142
        %2212 = vmatpush.bf16.msra.mxu0 %v2141
        %2213 = vmatpush.bf16.msra.mxu0 %v2140
        %2214 = vmatpush.bf16.msra.mxu0 %v2139
        %2215 = vmatpush.bf16.msra.mxu0 %v2138
        %2216 = vmatmul.bf16.gmra.mxu0 %v1998
        %v2217 = vpop.f32.mrf.mxu0
        %v2218 = vadd.f32 %v2204, %v2217
        %v2219 = vpop.f32.mrf.mxu0
        %v2220 = vadd.f32 %v2206, %v2219
        %2221 = vdwg.mxu0
        %2222 = vmatpush.bf16.msra.mxu0 %v2153
        %2223 = vmatpush.bf16.msra.mxu0 %v2152
        %2224 = vmatpush.bf16.msra.mxu0 %v2151
        %2225 = vmatpush.bf16.msra.mxu0 %v2150
        %2226 = vmatpush.bf16.msra.mxu0 %v2149
        %2227 = vmatpush.bf16.msra.mxu0 %v2148
        %2228 = vmatpush.bf16.msra.mxu0 %v2147
        %2229 = vmatpush.bf16.msra.mxu0 %v2146
        %2230 = vmatmul.bf16.gmra.mxu0 %v1999
        %v2231 = vpop.f32.mrf.mxu0
        %v2232 = vadd.f32 %v2218, %v2231
        %v2233 = vpop.f32.mrf.mxu0
        %v2234 = vadd.f32 %v2220, %v2233
        %2235 = vdwg.mxu0
        %2236 = vmatpush.bf16.msra.mxu0 %v2161
        %2237 = vmatpush.bf16.msra.mxu0 %v2160
        %2238 = vmatpush.bf16.msra.mxu0 %v2159
        %2239 = vmatpush.bf16.msra.mxu0 %v2158
        %2240 = vmatpush.bf16.msra.mxu0 %v2157
        %2241 = vmatpush.bf16.msra.mxu0 %v2156
        %2242 = vmatpush.bf16.msra.mxu0 %v2155
        %2243 = vmatpush.bf16.msra.mxu0 %v2154
        %2244 = vmatmul.bf16.gmra.mxu0 %v2000
        %v2245 = vpop.f32.mrf.mxu0
        %v2246 = vadd.f32 %v2232, %v2245
        %v2247 = vpop.f32.mrf.mxu0
        %v2248 = vadd.f32 %v2234, %v2247
        %2249 = vdwg.mxu0
        %v2250 = vadd.f32 %v1697, %v2246
        %v2251 = vadd.f32 %v1698, %v2248
        %2252 = vadd.xlane.f32.xlu0 %v2250
        %v2253 = vpop.xlane.xlu0 %2252
        %2254 = vadd.xlane.f32.xlu0 %v2251
        %v2255 = vpop.xlane.xlu0 %2254
        %v2256 = vmul.f32 %v2253, %v1656
        %v2257 = vmul.f32 %v2255, %v1656
        %v2258 = vsub.f32 %v2250, %v2256
        %v2259 = vsub.f32 %v2251, %v2257
        %v2260 = vmul.f32 %v2258, %v2258
        %v2261 = vmul.f32 %v2259, %v2259
        %2262 = vadd.xlane.f32.xlu0 %v2260
        %v2263 = vpop.xlane.xlu0 %2262
        %2264 = vadd.xlane.f32.xlu0 %v2261
        %v2265 = vpop.xlane.xlu0 %2264
        %v2266 = vmul.f32 %v2263, %v1656
        %v2267 = vmul.f32 %v2265, %v1656
        %v2268 = vadd.f32 %v2266, 1e-05
        %v2269 = vadd.f32 %v2267, 1e-05
        %v2270 = vrsqrt.pop %v2268
        %v2271 = vmul.f32 %v2270, %v2268
        %v2272 = vmul.f32 %v2271, %v2270
        %v2273 = vmul.f32 0.5, %v2272
        %v2274 = vsub.f32 1.5, %v2273
        %v2275 = vmul.f32 %v2270, %v2274
        %vm2276 = vweird.f32 %v2268
        %vm2277 = vweird.f32 %v2270
        %vm2278 = vmor %vm2276, %vm2277
        %v2279 = vsel %vm2278, %v2270, %v2275
        %v2280 = vrsqrt.pop %v2269
        %v2281 = vmul.f32 %v2280, %v2269
        %v2282 = vmul.f32 %v2281, %v2280
        %v2283 = vmul.f32 0.5, %v2282
        %v2284 = vsub.f32 1.5, %v2283
        %v2285 = vmul.f32 %v2280, %v2284
        %vm2286 = vweird.f32 %v2269
        %vm2287 = vweird.f32 %v2280
        %vm2288 = vmor %vm2286, %vm2287
        %v2289 = vsel %vm2288, %v2280, %v2285
        %v2290 = vmul.f32 %v2258, %v2279
        %v2291 = vmul.f32 %v2259, %v2289
        %v2292 = vperm.slane %v900, 4
        %v2293 = vmul.f32 %v2290, %v2292
        %v2294 = vmul.f32 %v2291, %v2292
        %v2295 = vperm.slane %v900, 5
        %v2296 = vadd.f32 %v2293, %v2295
        %v2297 = vadd.f32 %v2294, %v2295
        %2298 = vst [vmem:[#allocation2] sm:$0xff] %v2296
        %2299 = vst [vmem:[#allocation2 + $0x8] sm:$0xff] %v2297
        %p2300 = scmp.eq.s32.totalorder %s34, 1
        // Predicated region
        $region93: #{dsvit_forward.1} parent=71 // pred_check
          %p2301 = pneg %p2300
        $region94: #{dsvit_forward.1} parent=71 // pred_check_branch
          %2303 = sbr.rel (%p2301) target = $region96
        $region95: #{dsvit_forward.1} parent=71 // pred_region
          %v2305 = vrot.slane %v2297, 7
          %vm2307 = vcmask 1040384
          %v2308 = vsel %vm2307, %v2296, %v2305
          %vm2309 = vcmask 1041408
          %v2310 = vsel %vm2309, %v2308, 0.0
          %2311 = vadd.xlane.f32.xlu0 %v2310
          %v2312 = vpop.xlane.xlu0 %2311
          %v2313 = vmul.f32 %v2312, %v1656
          %v2314 = vsub.f32 %v2308, %v2313
          %v2315 = vmul.f32 %v2314, %v2314
          %v2316 = vsel %vm2309, %v2315, 0.0
          %2317 = vadd.xlane.f32.xlu0 %v2316
          %v2318 = vpop.xlane.xlu0 %2317
          %v2319 = vmul.f32 %v2318, %v1656
          %v2320 = vadd.f32 %v2319, 1e-05
          %v2321 = vrsqrt.pop %v2320
          %v2322 = vmul.f32 %v2321, %v2320
          %v2323 = vmul.f32 %v2322, %v2321
          %v2324 = vmul.f32 0.5, %v2323
          %v2325 = vsub.f32 1.5, %v2324
          %v2326 = vmul.f32 %v2321, %v2325
          %vm2327 = vweird.f32 %v2320
          %vm2328 = vweird.f32 %v2321
          %vm2329 = vmor %vm2327, %vm2328
          %v2330 = vsel %vm2329, %v2321, %v2326
          %v2331 = vmul.f32 %v2314, %v2330
          %v2332 = vperm.slane %v900, 6
          %v2333 = vmul.f32 %v2331, %v2332
          %v2334 = vperm.slane %v900, 7
          %v2335 = vadd.f32 %v2333, %v2334
          %2336 = vst [vmem:[#allocation11] sm:$0x3] %v2335
        $region96: #{dsvit_forward.1} parent=71 // pred_fallthru
          _
        // Predicated region
        $region97: #{dsvit_forward.1} parent=71 // pred_check
          %p2337 = pneg %p355
        $region98: #{dsvit_forward.1} parent=71 // pred_check_branch
          %2339 = sbr.rel (%p2337) target = $region100
        $region99: #{dsvit_forward.1} parent=71 // pred_region
          %2341 = vsyncadd [#allocation5], 0
          %s2343 = sshll.u32 [#allocation11], 4
          %s2344 = int_to_ptr.vmem [resolvable:$true] %s2343
          %s2345 = sshll.u32 %s13, 4
          %s2346 = int_to_ptr.hbm [resolvable:$true] %s2345
          %2348 = dma.vmem_to_hbm [thread:$0]  %s2344, 32, %s2346, [#allocation5]
        $region100: #{dsvit_forward.1} parent=71 // pred_fallthru
          _
        // Predicated region
        $region101: #{dsvit_forward.1} parent=71 // pred_check
          %p2349 = pneg %p355
        $region102: #{dsvit_forward.1} parent=71 // pred_check_branch
          %2351 = sbr.rel (%p2349) target = $region104
        $region103: #{dsvit_forward.1} parent=71 // pred_region
          %2353 = dma.done [#allocation5], 32
        $region104: #{dsvit_forward.1} parent=71 // pred_fallthru
          _
      $region72: #{dsvit_forward.1} parent=5 // pred_fallthru
        _
      %p2354 = scmp.le.s32.totalorder 2, %s29
      // Predicated region
      $region105: #{dsvit_forward.1} parent=5 // pred_check
        %p2355 = pneg %p2354
      $region106: #{dsvit_forward.1} parent=5 // pred_check_branch
        %2357 = sbr.rel (%p2355) target = $region108
      $region107: #{dsvit_forward.1} parent=5 // pred_region
        %s2358 = ssub.s32 %s29, 2
      $region108: #{dsvit_forward.1} parent=5 // pred_fallthru
        _
    $region6: #{dsvit_forward.1} parent=1 // loop_footer
      %s33 = sadd.s32 1, %s29
    $region7: #{dsvit_forward.1} parent=1 // loop_footer_branch
      %28 = sbr.rel target = $region3
    $region8: #{dsvit_forward.1} parent=1 // loop_exit
      _
    %2359 = vsyncpa [#allocation4], 1
    %s2360 = scalar_lea.sflag [#allocation4], 1
    %2361 = vsyncpa %s2360, 1
    %2362 = vsyncpa [#allocation7], 1
    %s2363 = scalar_lea.sflag [#allocation7], 1
    %2364 = vsyncpa %s2363, 1
    %2365 = vsyncpa [#allocation10], 1
    %s2366 = scalar_lea.sflag [#allocation10], 1
    %2367 = vsyncpa %s2366, 1
    %2368 = vsyncpa [#allocation5], 1
    %s2369 = scalar_lea.sflag [#allocation5], 1
    %2370 = vsyncpa %s2369, 1

</llo_original>
